<compile_context>
chip_gen: v5e
topology: v5e:2x2
jax: 0.10.0
libtpu: 0.0.40
codegen_flags: <defaults>
</compile_context>

<pallas_src>
import math
from functools import partial

import jax
import jax.numpy as jnp
from jax import lax
from jax.experimental import pallas as pl
from jax.experimental.pallas import tpu as pltpu  # noqa: F401  (TPU backend)

# ----------------------------- configuration -------------------------------
B = 2                 # batch
S = 8                 # src_len
D = 32                # embed_dim (d_model)
NUM_HEADS = 4
FFN = 64              # encoder_ffn_dim
NUM_LAYERS = 2
VOCAB = 50
MAX_POS = 64
POS_OFFSET = 2        # BART learned positional embedding offset
D_IMG = 64            # d_image_encoder (nf_resnet50 is 2048; small synthetic stand-in)
NUM_IMG_TOK = 2       # num_image_tokens
PAD_ID = 1            # padding_idx
IMG_FEAT_ID = 40
CLS_TOKEN_ID = 41
EMBED_SCALE = math.sqrt(D)   # encoder.embed_scale (scale_embedding=True)
EPS = 1e-5

# TODO(synk): final encoder `layer_norm` is None for standard BART config
# (add_final_layer_norm=False), so it is skipped, matching `if self.layer_norm:`.


def _gelu(x):
    # TODO(synk): PyTorch F.gelu uses exact erf-based GELU; tanh approximation used here.
    return 0.5 * x * (1.0 + jnp.tanh(math.sqrt(2.0 / math.pi) * (x + 0.044715 * x ** 3)))


# ------------------------------ fused Pallas kernel -------------------------
def _fused_encoder_kernel(tok_ref, pos_ref, sel_ref, amask_ref, vis_ref,
                          wp_ref, bp_ref, wlin_ref, blin_ref, lng_ref, lnb_ref,
                          *rest, num_heads, eps, scale, num_img_tokens, batch):
    """Entire MultiModalBartEncoder forward on one (B*S, D) resident tile.

    rest = 12 weight refs per encoder layer (unrolled) followed by the output ref.
    """
    o_ref = rest[-1]
    layer_refs = rest[:-1]
    n_per_layer = 12
    num_layers = len(layer_refs) // n_per_layer

    N, Dm = tok_ref.shape          # N = B*S (flattened batch in sublanes)
    hd = Dm // num_heads
    scaling = hd ** -0.5

    def layer_norm(x, g, b):
        mu = jnp.mean(x, axis=-1, keepdims=True)
        var = jnp.mean((x - mu) ** 2, axis=-1, keepdims=True)
        return (x - mu) * lax.rsqrt(var + eps) * g + b

    # ---- ImageEmbedding (proj_image_features + linear) + multimodal scatter ----
    combined = tok_ref[...]                                   # (N, D) token embeddings
    vis = vis_ref[...]                                        # (B, D_IMG)
    wlin = wlin_ref[...]
    blin = blin_ref[...]
    for t in range(num_img_tokens):
        proj_t = (jnp.dot(vis, wp_ref[:, t * Dm:(t + 1) * Dm],
                          preferred_element_type=jnp.float32)
                  + bp_ref[:, t * Dm:(t + 1) * Dm])           # (B, D)
        emb_t = (jnp.dot(proj_t, wlin, preferred_element_type=jnp.float32)
                 + blin)                                      # (B, D)
        for b in range(batch):
            c = t * batch + b
            cond = sel_ref[:, c:c + 1] > 0.5                  # (N, 1) exact selection
            row = jnp.broadcast_to(emb_t[b:b + 1, :], (N, Dm))
            combined = jnp.where(cond, row, combined)

    # ---- embed_scale + positional embedding + layernorm_embedding ----
    x = combined * scale + pos_ref[...]
    x = layer_norm(x, lng_ref[...], lnb_ref[...])
    # dropout: eval mode -> identity

    add_mask = amask_ref[...]                                 # (N, N) block-diag key mask

    # ---- encoder layers, unrolled inside the kernel ----
    for li in range(num_layers):
        (wqkv_ref, bqkv_ref, wo_ref, bo_ref, g1_ref, be1_ref,
         w1_ref, b1_ref, w2_ref, b2_ref, g2_ref, be2_ref) = \
            layer_refs[li * n_per_layer:(li + 1) * n_per_layer]

        # fused QKV projection: one (N,D) x (D,3D) pass through the MXU
        qkv = jnp.dot(x, wqkv_ref[...], preferred_element_type=jnp.float32) + bqkv_ref[...]
        q = qkv[:, 0 * Dm:1 * Dm] * scaling
        k = qkv[:, 1 * Dm:2 * Dm]
        v = qkv[:, 2 * Dm:3 * Dm]

        # multi-head attention; head outputs folded straight into Wo (no concat)
        wo = wo_ref[...]
        attn = jnp.zeros((N, Dm), jnp.float32)
        for h in range(num_heads):
            lo = h * hd
            qh = q[:, lo:lo + hd]
            kh = k[:, lo:lo + hd]
            vh = v[:, lo:lo + hd]
            s = lax.dot_general(qh, kh, (((1,), (1,)), ((), ())),
                                preferred_element_type=jnp.float32)   # (N, N)
            s = s + add_mask                  # masks cross-batch pairs + padded keys
            m = jnp.max(s, axis=-1, keepdims=True)
            e = jnp.exp(s - m)
            inv_l = pl.reciprocal(jnp.sum(e, axis=-1, keepdims=True), approx=False)
            oh = jnp.dot(e, vh, preferred_element_type=jnp.float32) * inv_l  # (N, hd)
            attn = attn + jnp.dot(oh, wo[lo:lo + hd, :],
                                  preferred_element_type=jnp.float32)
        attn = attn + bo_ref[...]

        # residual + self_attn_layer_norm
        x = layer_norm(x + attn, g1_ref[...], be1_ref[...])

        # feed forward, residual + final_layer_norm
        h1 = _gelu(jnp.dot(x, w1_ref[...], preferred_element_type=jnp.float32) + b1_ref[...])
        h2 = jnp.dot(h1, w2_ref[...], preferred_element_type=jnp.float32) + b2_ref[...]
        x = layer_norm(x + h2, g2_ref[...], be2_ref[...])

    o_ref[...] = x.astype(o_ref.dtype)


# ------------------------------ forward (Pallas) ----------------------------
def forward_pallas(input_ids, visual, attention_mask, params):
    N = B * S

    # --- host/XLA-side index bookkeeping only (no model FLOPs) ---
    mask = (input_ids == IMG_FEAT_ID) | (input_ids == CLS_TOKEN_ID)            # (B, S)
    tok_emb = params["embed_tokens"][input_ids].reshape(N, D)                  # exact gather
    pos_emb = jnp.tile(params["pos_table"][jnp.arange(S) + POS_OFFSET], (B, 1))  # (N, D)

    # selection matrix mapping flattened positions -> (image token t, batch b) column
    idx = jnp.clip(jnp.cumsum(mask.astype(jnp.int32), axis=1) - 1, 0, NUM_IMG_TOK - 1)
    col = idx * B + jnp.arange(B)[:, None]                                     # (B, S)
    sel = ((col[..., None] == jnp.arange(NUM_IMG_TOK * B)) & mask[..., None])
    sel = sel.reshape(N, NUM_IMG_TOK * B).astype(jnp.float32)                  # (N, T*B)

    # block-diagonal additive attention mask: forbids cross-batch pairs + padded keys
    same_batch = (jnp.arange(N)[:, None] // S) == (jnp.arange(N)[None, :] // S)
    key_ok = (attention_mask.reshape(N) != 0)[None, :]
    amask = jnp.where(same_batch & key_ok, 0.0, -1e9).astype(jnp.float32)      # (N, N)

    # fuse QKV weights per layer (pure weight re-packing, numerically exact)
    layer_args = []
    for lp in params["layers"]:
        wqkv = jnp.concatenate([lp["wq"], lp["wk"], lp["wv"]], axis=1)
        bqkv = jnp.concatenate([lp["bq"], lp["bk"], lp["bv"]], axis=1)
        layer_args += [wqkv, bqkv, lp["wo"], lp["bo"], lp["g1"], lp["be1"],
                       lp["w1"], lp["b1"], lp["w2"], lp["b2"], lp["g2"], lp["be2"]]

    out = pl.pallas_call(
        partial(_fused_encoder_kernel, num_heads=NUM_HEADS, eps=EPS,
                scale=EMBED_SCALE, num_img_tokens=NUM_IMG_TOK, batch=B),
        out_shape=jax.ShapeDtypeStruct((N, D), jnp.float32),
    )(tok_emb, pos_emb, sel, amask, visual,
      params["img_w_proj"], params["img_b_proj"],
      params["img_w_lin"], params["img_b_lin"],
      params["ln_emb_g"], params["ln_emb_b"], *layer_args)

    encoder_states, all_attentions = [], []
    return out.reshape(B, S, D), encoder_states, all_attentions


forward_pallas_jit = jax.jit(forward_pallas)


# ------------------------------ pure-JAX reference --------------------------
def _ln_ref(x, g, b):
    mu = x.mean(-1, keepdims=True)
    var = ((x - mu) ** 2).mean(-1, keepdims=True)
    return (x - mu) / jnp.sqrt(var + EPS) * g + b


def forward_ref(input_ids, visual, attention_mask, params):
    mask = (input_ids == IMG_FEAT_ID) | (input_ids == CLS_TOKEN_ID)
    proj = visual @ params["img_w_proj"] + params["img_b_proj"]
    img_emb = (proj.reshape(B * NUM_IMG_TOK, D) @ params["img_w_lin"]
               + params["img_b_lin"]).reshape(B, NUM_IMG_TOK, D)
    idx = jnp.clip(jnp.cumsum(mask.astype(jnp.int32), axis=1) - 1, 0, NUM_IMG_TOK - 1)
    img_gathered = jnp.take_along_axis(
        img_emb, jnp.broadcast_to(idx[..., None], (B, S, D)), axis=1)
    tok_emb = params["embed_tokens"][input_ids]
    combined = jnp.where(mask[..., None], img_gathered, tok_emb)
    pos_emb = params["pos_table"][jnp.arange(S) + POS_OFFSET]
    x = _ln_ref(combined * EMBED_SCALE + pos_emb, params["ln_emb_g"], params["ln_emb_b"])

    add_mask = jnp.where(attention_mask == 0, -1e9, 0.0)[:, None, None, :]    # (B,1,1,S)
    hd = D // NUM_HEADS
    for lp in params["layers"]:
        q = (x @ lp["wq"] + lp["bq"]) * (hd ** -0.5)
        k = x @ lp["wk"] + lp["bk"]
        v = x @ lp["wv"] + lp["bv"]
        qh = q.reshape(B, S, NUM_HEADS, hd).transpose(0, 2, 1, 3)
        kh = k.reshape(B, S, NUM_HEADS, hd).transpose(0, 2, 1, 3)
        vh = v.reshape(B, S, NUM_HEADS, hd).transpose(0, 2, 1, 3)
        s = jnp.einsum("bhqd,bhkd->bhqk", qh, kh) + add_mask
        p = jax.nn.softmax(s, axis=-1)
        a = jnp.einsum("bhqk,bhkd->bhqd", p, vh).transpose(0, 2, 1, 3).reshape(B, S, D)
        a = a @ lp["wo"] + lp["bo"]
        x = _ln_ref(x + a, lp["g1"], lp["be1"])
        h = _gelu(x @ lp["w1"] + lp["b1"]) @ lp["w2"] + lp["b2"]
        x = _ln_ref(x + h, lp["g2"], lp["be2"])
    return x


# ------------------------------ parameter init ------------------------------
def init_params(key):
    def nrm(k, shape, scale=0.05):
        return scale * jax.random.normal(k, shape, jnp.float32)

    keys = jax.random.split(key, 16 + NUM_LAYERS)
    embed_tokens = nrm(keys[0], (VOCAB, D), 1.0)
    embed_tokens = embed_tokens.at[PAD_ID].set(0.0)   # nn.Embedding padding_idx row = 0
    params = {
        "embed_tokens": embed_tokens,
        "pos_table": nrm(keys[1], (MAX_POS + POS_OFFSET, D), 1.0),
        "ln_emb_g": 1.0 + nrm(keys[2], (1, D), 0.01),
        "ln_emb_b": nrm(keys[3], (1, D), 0.01),
        "img_w_proj": nrm(keys[4], (D_IMG, NUM_IMG_TOK * D)),
        "img_b_proj": nrm(keys[5], (1, NUM_IMG_TOK * D)),
        "img_w_lin": nrm(keys[6], (D, D)),
        "img_b_lin": nrm(keys[7], (1, D)),
        "layers": [],
    }
    for li in range(NUM_LAYERS):
        lk = jax.random.split(keys[16 + li], 16)
        params["layers"].append({
            "wq": nrm(lk[0], (D, D)), "bq": nrm(lk[1], (1, D)),
            "wk": nrm(lk[2], (D, D)), "bk": nrm(lk[3], (1, D)),
            "wv": nrm(lk[4], (D, D)), "bv": nrm(lk[5], (1, D)),
            "wo": nrm(lk[6], (D, D)), "bo": nrm(lk[7], (1, D)),
            "g1": 1.0 + nrm(lk[8], (1, D), 0.01), "be1": nrm(lk[9], (1, D), 0.01),
            "w1": nrm(lk[10], (D, FFN)), "b1": nrm(lk[11], (1, FFN)),
            "w2": nrm(lk[12], (FFN, D)), "b2": nrm(lk[13], (1, D)),
            "g2": 1.0 + nrm(lk[14], (1, D), 0.01), "be2": nrm(lk[15], (1, D), 0.01),
        })
    return params


# ----------------------------------- main -----------------------------------
if __name__ == "__main__":
    key = jax.random.PRNGKey(0)
    pkey, vkey = jax.random.split(key)
    params = init_params(pkey)

    # exactly NUM_IMG_TOK special (cls + img_feat) tokens per row
    input_ids = jnp.array(
        [[CLS_TOKEN_ID, IMG_FEAT_ID, 5, 6, 7, 8, 9, 10],
         [CLS_TOKEN_ID, IMG_FEAT_ID, 11, 12, 13, 14, PAD_ID, PAD_ID]],
        dtype=jnp.int32)
    attention_mask = jnp.array(
        [[1, 1, 1, 1, 1, 1, 1, 1],
         [1, 1, 1, 1, 1, 1, 0, 0]], dtype=jnp.int32)
    # pooled visual features standing in for the nf_resnet50 backbone output
    visual = jax.random.normal(vkey, (B, D_IMG), jnp.float32)

    out, enc_states, attns = forward_pallas_jit(input_ids, visual, attention_mask, params)
    out = jax.block_until_ready(out)

    out_ref = forward_ref(input_ids, visual, attention_mask, params)
    assert out.shape == (B, S, D)
    assert jnp.allclose(out, out_ref, atol=1e-4, rtol=1e-4), (
        float(jnp.max(jnp.abs(out - out_ref))))
    print("KERNEL_OK")
</pallas_src>

<mosaic_0001>
module attributes {stable_mosaic.version = 11 : i64} {
  func.func @_fused_encoder_kernel(%arg0: memref<16x32xf32, #tpu.memory_space<vmem>>, %arg1: memref<16x32xf32, #tpu.memory_space<vmem>>, %arg2: memref<16x4xf32, #tpu.memory_space<vmem>>, %arg3: memref<16x16xf32, #tpu.memory_space<vmem>>, %arg4: memref<2x64xf32, #tpu.memory_space<vmem>>, %arg5: memref<64x64xf32, #tpu.memory_space<vmem>>, %arg6: memref<1x64xf32, #tpu.memory_space<vmem>>, %arg7: memref<32x32xf32, #tpu.memory_space<vmem>>, %arg8: memref<1x32xf32, #tpu.memory_space<vmem>>, %arg9: memref<1x32xf32, #tpu.memory_space<vmem>>, %arg10: memref<1x32xf32, #tpu.memory_space<vmem>>, %arg11: memref<32x96xf32, #tpu.memory_space<vmem>>, %arg12: memref<1x96xf32, #tpu.memory_space<vmem>>, %arg13: memref<32x32xf32, #tpu.memory_space<vmem>>, %arg14: memref<1x32xf32, #tpu.memory_space<vmem>>, %arg15: memref<1x32xf32, #tpu.memory_space<vmem>>, %arg16: memref<1x32xf32, #tpu.memory_space<vmem>>, %arg17: memref<32x64xf32, #tpu.memory_space<vmem>>, %arg18: memref<1x64xf32, #tpu.memory_space<vmem>>, %arg19: memref<64x32xf32, #tpu.memory_space<vmem>>, %arg20: memref<1x32xf32, #tpu.memory_space<vmem>>, %arg21: memref<1x32xf32, #tpu.memory_space<vmem>>, %arg22: memref<1x32xf32, #tpu.memory_space<vmem>>, %arg23: memref<32x96xf32, #tpu.memory_space<vmem>>, %arg24: memref<1x96xf32, #tpu.memory_space<vmem>>, %arg25: memref<32x32xf32, #tpu.memory_space<vmem>>, %arg26: memref<1x32xf32, #tpu.memory_space<vmem>>, %arg27: memref<1x32xf32, #tpu.memory_space<vmem>>, %arg28: memref<1x32xf32, #tpu.memory_space<vmem>>, %arg29: memref<32x64xf32, #tpu.memory_space<vmem>>, %arg30: memref<1x64xf32, #tpu.memory_space<vmem>>, %arg31: memref<64x32xf32, #tpu.memory_space<vmem>>, %arg32: memref<1x32xf32, #tpu.memory_space<vmem>>, %arg33: memref<1x32xf32, #tpu.memory_space<vmem>>, %arg34: memref<1x32xf32, #tpu.memory_space<vmem>>, %arg35: memref<16x32xf32, #tpu.memory_space<vmem>>) attributes {dimension_semantics = [], scalar_prefetch = 0 : i64, scratch_operands = 0 : i64, tpu.core_type = #tpu.core_type<tc>} {
    %c0 = arith.constant 0 : index
    %c0_0 = arith.constant 0 : index
    %0 = vector.load %arg0[%c0, %c0_0] : memref<16x32xf32, #tpu.memory_space<vmem>>, vector<16x32xf32>
    %c0_1 = arith.constant 0 : index
    %c0_2 = arith.constant 0 : index
    %1 = vector.load %arg4[%c0_1, %c0_2] : memref<2x64xf32, #tpu.memory_space<vmem>>, vector<2x64xf32>
    %c0_3 = arith.constant 0 : index
    %c0_4 = arith.constant 0 : index
    %2 = vector.load %arg7[%c0_3, %c0_4] : memref<32x32xf32, #tpu.memory_space<vmem>>, vector<32x32xf32>
    %c0_5 = arith.constant 0 : index
    %c0_6 = arith.constant 0 : index
    %3 = vector.load %arg8[%c0_5, %c0_6] : memref<1x32xf32, #tpu.memory_space<vmem>>, vector<1x32xf32>
    %c0_7 = arith.constant 0 : index
    %c0_8 = arith.constant 0 : index
    %4 = vector.load %arg5[%c0_7, %c0_8] : memref<64x64xf32, #tpu.memory_space<vmem>>, vector<64x32xf32>
    %cst = arith.constant dense<0.000000e+00> : vector<2x32xf32>
    %5 = tpu.matmul %1, %4, %cst {dimension_numbers = #tpu.dot_dimension_numbers<[1], [0], [0], [1], [0, 0, 1, 1], [], []>} : vector<2x64xf32>, vector<64x32xf32>, vector<2x32xf32> -> vector<2x32xf32>
    %c0_9 = arith.constant 0 : index
    %c0_10 = arith.constant 0 : index
    %6 = vector.load %arg6[%c0_9, %c0_10] : memref<1x64xf32, #tpu.memory_space<vmem>>, vector<1x32xf32>
    %7 = vector.broadcast %6 : vector<1x32xf32> to vector<2x32xf32>
    %8 = arith.addf %5, %7 : vector<2x32xf32>
    %cst_11 = arith.constant dense<0.000000e+00> : vector<2x32xf32>
    %9 = tpu.matmul %8, %2, %cst_11 {dimension_numbers = #tpu.dot_dimension_numbers<[1], [0], [0], [1], [0, 0, 1, 1], [], []>} : vector<2x32xf32>, vector<32x32xf32>, vector<2x32xf32> -> vector<2x32xf32>
    %10 = vector.broadcast %3 : vector<1x32xf32> to vector<2x32xf32>
    %11 = arith.addf %9, %10 : vector<2x32xf32>
    %c0_12 = arith.constant 0 : index
    %c0_13 = arith.constant 0 : index
    %12 = vector.load %arg2[%c0_12, %c0_13] : memref<16x4xf32, #tpu.memory_space<vmem>>, vector<16x1xf32>
    %cst_14 = arith.constant 5.000000e-01 : f32
    %13 = vector.broadcast %cst_14 : f32 to vector<16x1xf32>
    %14 = arith.cmpf ogt, %12, %13 : vector<16x1xf32>
    %15 = vector.extract_strided_slice %11 {offsets = [0, 0], sizes = [1, 32], strides = [1, 1]} : vector<2x32xf32> to vector<1x32xf32>
    %16 = vector.shape_cast %15 : vector<1x32xf32> to vector<1x32xf32>
    %17 = vector.broadcast %16 : vector<1x32xf32> to vector<16x32xf32>
    %18 = vector.shape_cast %14 : vector<16x1xi1> to vector<16x1xi1>
    %19 = vector.broadcast %18 : vector<16x1xi1> to vector<16x32xi1>
    %20 = arith.select %19, %17, %0 : vector<16x32xi1>, vector<16x32xf32>
    %c0_15 = arith.constant 0 : index
    %c1 = arith.constant 1 : index
    %21 = vector.load %arg2[%c0_15, %c1] : memref<16x4xf32, #tpu.memory_space<vmem>>, vector<16x1xf32>
    %cst_16 = arith.constant 5.000000e-01 : f32
    %22 = vector.broadcast %cst_16 : f32 to vector<16x1xf32>
    %23 = arith.cmpf ogt, %21, %22 : vector<16x1xf32>
    %24 = vector.extract_strided_slice %11 {offsets = [1, 0], sizes = [1, 32], strides = [1, 1]} : vector<2x32xf32> to vector<1x32xf32>
    %25 = vector.shape_cast %24 : vector<1x32xf32> to vector<1x32xf32>
    %26 = vector.broadcast %25 : vector<1x32xf32> to vector<16x32xf32>
    %27 = vector.shape_cast %23 : vector<16x1xi1> to vector<16x1xi1>
    %28 = vector.broadcast %27 : vector<16x1xi1> to vector<16x32xi1>
    %29 = arith.select %28, %26, %20 : vector<16x32xi1>, vector<16x32xf32>
    %c0_17 = arith.constant 0 : index
    %c32 = arith.constant 32 : index
    %30 = vector.load %arg5[%c0_17, %c32] : memref<64x64xf32, #tpu.memory_space<vmem>>, vector<64x32xf32>
    %cst_18 = arith.constant dense<0.000000e+00> : vector<2x32xf32>
    %31 = tpu.matmul %1, %30, %cst_18 {dimension_numbers = #tpu.dot_dimension_numbers<[1], [0], [0], [1], [0, 0, 1, 1], [], []>} : vector<2x64xf32>, vector<64x32xf32>, vector<2x32xf32> -> vector<2x32xf32>
    %c0_19 = arith.constant 0 : index
    %c32_20 = arith.constant 32 : index
    %32 = vector.load %arg6[%c0_19, %c32_20] : memref<1x64xf32, #tpu.memory_space<vmem>>, vector<1x32xf32>
    %33 = vector.broadcast %32 : vector<1x32xf32> to vector<2x32xf32>
    %34 = arith.addf %31, %33 : vector<2x32xf32>
    %cst_21 = arith.constant dense<0.000000e+00> : vector<2x32xf32>
    %35 = tpu.matmul %34, %2, %cst_21 {dimension_numbers = #tpu.dot_dimension_numbers<[1], [0], [0], [1], [0, 0, 1, 1], [], []>} : vector<2x32xf32>, vector<32x32xf32>, vector<2x32xf32> -> vector<2x32xf32>
    %36 = vector.broadcast %3 : vector<1x32xf32> to vector<2x32xf32>
    %37 = arith.addf %35, %36 : vector<2x32xf32>
    %c0_22 = arith.constant 0 : index
    %c2 = arith.constant 2 : index
    %38 = vector.load %arg2[%c0_22, %c2] : memref<16x4xf32, #tpu.memory_space<vmem>>, vector<16x1xf32>
    %cst_23 = arith.constant 5.000000e-01 : f32
    %39 = vector.broadcast %cst_23 : f32 to vector<16x1xf32>
    %40 = arith.cmpf ogt, %38, %39 : vector<16x1xf32>
    %41 = vector.extract_strided_slice %37 {offsets = [0, 0], sizes = [1, 32], strides = [1, 1]} : vector<2x32xf32> to vector<1x32xf32>
    %42 = vector.shape_cast %41 : vector<1x32xf32> to vector<1x32xf32>
    %43 = vector.broadcast %42 : vector<1x32xf32> to vector<16x32xf32>
    %44 = vector.shape_cast %40 : vector<16x1xi1> to vector<16x1xi1>
    %45 = vector.broadcast %44 : vector<16x1xi1> to vector<16x32xi1>
    %46 = arith.select %45, %43, %29 : vector<16x32xi1>, vector<16x32xf32>
    %c0_24 = arith.constant 0 : index
    %c3 = arith.constant 3 : index
    %47 = vector.load %arg2[%c0_24, %c3] : memref<16x4xf32, #tpu.memory_space<vmem>>, vector<16x1xf32>
    %cst_25 = arith.constant 5.000000e-01 : f32
    %48 = vector.broadcast %cst_25 : f32 to vector<16x1xf32>
    %49 = arith.cmpf ogt, %47, %48 : vector<16x1xf32>
    %50 = vector.extract_strided_slice %37 {offsets = [1, 0], sizes = [1, 32], strides = [1, 1]} : vector<2x32xf32> to vector<1x32xf32>
    %51 = vector.shape_cast %50 : vector<1x32xf32> to vector<1x32xf32>
    %52 = vector.broadcast %51 : vector<1x32xf32> to vector<16x32xf32>
    %53 = vector.shape_cast %49 : vector<16x1xi1> to vector<16x1xi1>
    %54 = vector.broadcast %53 : vector<16x1xi1> to vector<16x32xi1>
    %55 = arith.select %54, %52, %46 : vector<16x32xi1>, vector<16x32xf32>
    %cst_26 = arith.constant 5.65685415 : f32
    %56 = vector.broadcast %cst_26 : f32 to vector<16x32xf32>
    %57 = arith.mulf %55, %56 : vector<16x32xf32>
    %c0_27 = arith.constant 0 : index
    %c0_28 = arith.constant 0 : index
    %58 = vector.load %arg1[%c0_27, %c0_28] : memref<16x32xf32, #tpu.memory_space<vmem>>, vector<16x32xf32>
    %59 = arith.addf %57, %58 : vector<16x32xf32>
    %c0_29 = arith.constant 0 : index
    %c0_30 = arith.constant 0 : index
    %60 = vector.load %arg9[%c0_29, %c0_30] : memref<1x32xf32, #tpu.memory_space<vmem>>, vector<1x32xf32>
    %c0_31 = arith.constant 0 : index
    %c0_32 = arith.constant 0 : index
    %61 = vector.load %arg10[%c0_31, %c0_32] : memref<1x32xf32, #tpu.memory_space<vmem>>, vector<1x32xf32>
    %cst_33 = arith.constant dense<0.000000e+00> : vector<16xf32>
    %62 = vector.multi_reduction <add>, %59, %cst_33 [1] : vector<16x32xf32> to vector<16xf32>
    %63 = vector.shape_cast %62 : vector<16xf32> to vector<16x1xf32>
    %cst_34 = arith.constant 3.200000e+01 : f32
    %64 = vector.broadcast %cst_34 : f32 to vector<16x1xf32>
    %65 = arith.divf %63, %64 : vector<16x1xf32>
    %66 = vector.broadcast %65 : vector<16x1xf32> to vector<16x32xf32>
    %67 = arith.subf %59, %66 : vector<16x32xf32>
    %68 = arith.mulf %67, %67 : vector<16x32xf32>
    %cst_35 = arith.constant dense<0.000000e+00> : vector<16xf32>
    %69 = vector.multi_reduction <add>, %68, %cst_35 [1] : vector<16x32xf32> to vector<16xf32>
    %70 = vector.shape_cast %69 : vector<16xf32> to vector<16x1xf32>
    %cst_36 = arith.constant 3.200000e+01 : f32
    %71 = vector.broadcast %cst_36 : f32 to vector<16x1xf32>
    %72 = arith.divf %70, %71 : vector<16x1xf32>
    %73 = vector.broadcast %65 : vector<16x1xf32> to vector<16x32xf32>
    %74 = arith.subf %59, %73 : vector<16x32xf32>
    %cst_37 = arith.constant 9.99999974E-6 : f32
    %75 = vector.broadcast %cst_37 : f32 to vector<16x1xf32>
    %76 = arith.addf %72, %75 : vector<16x1xf32>
    %77 = math.rsqrt %76 : vector<16x1xf32>
    %78 = vector.broadcast %77 : vector<16x1xf32> to vector<16x32xf32>
    %79 = arith.mulf %74, %78 : vector<16x32xf32>
    %80 = vector.broadcast %60 : vector<1x32xf32> to vector<16x32xf32>
    %81 = arith.mulf %79, %80 : vector<16x32xf32>
    %82 = vector.broadcast %61 : vector<1x32xf32> to vector<16x32xf32>
    %83 = arith.addf %81, %82 : vector<16x32xf32>
    %c0_38 = arith.constant 0 : index
    %c0_39 = arith.constant 0 : index
    %84 = vector.load %arg3[%c0_38, %c0_39] : memref<16x16xf32, #tpu.memory_space<vmem>>, vector<16x16xf32>
    %c0_40 = arith.constant 0 : index
    %c0_41 = arith.constant 0 : index
    %85 = vector.load %arg11[%c0_40, %c0_41] : memref<32x96xf32, #tpu.memory_space<vmem>>, vector<32x96xf32>
    %cst_42 = arith.constant dense<0.000000e+00> : vector<16x96xf32>
    %86 = tpu.matmul %83, %85, %cst_42 {dimension_numbers = #tpu.dot_dimension_numbers<[1], [0], [0], [1], [0, 0, 1, 1], [], []>} : vector<16x32xf32>, vector<32x96xf32>, vector<16x96xf32> -> vector<16x96xf32>
    %c0_43 = arith.constant 0 : index
    %c0_44 = arith.constant 0 : index
    %87 = vector.load %arg12[%c0_43, %c0_44] : memref<1x96xf32, #tpu.memory_space<vmem>>, vector<1x96xf32>
    %88 = vector.broadcast %87 : vector<1x96xf32> to vector<16x96xf32>
    %89 = arith.addf %86, %88 : vector<16x96xf32>
    %90 = vector.extract_strided_slice %89 {offsets = [0, 0], sizes = [16, 32], strides = [1, 1]} : vector<16x96xf32> to vector<16x32xf32>
    %cst_45 = arith.constant 0.353553385 : f32
    %91 = vector.broadcast %cst_45 : f32 to vector<16x32xf32>
    %92 = arith.mulf %90, %91 : vector<16x32xf32>
    %93 = vector.extract_strided_slice %89 {offsets = [0, 32], sizes = [16, 32], strides = [1, 1]} : vector<16x96xf32> to vector<16x32xf32>
    %94 = vector.extract_strided_slice %89 {offsets = [0, 64], sizes = [16, 32], strides = [1, 1]} : vector<16x96xf32> to vector<16x32xf32>
    %c0_46 = arith.constant 0 : index
    %c0_47 = arith.constant 0 : index
    %95 = vector.load %arg13[%c0_46, %c0_47] : memref<32x32xf32, #tpu.memory_space<vmem>>, vector<32x32xf32>
    %cst_48 = arith.constant 0.000000e+00 : f32
    %96 = vector.broadcast %cst_48 : f32 to vector<16x32xf32>
    %97 = vector.extract_strided_slice %92 {offsets = [0, 0], sizes = [16, 8], strides = [1, 1]} : vector<16x32xf32> to vector<16x8xf32>
    %98 = vector.extract_strided_slice %93 {offsets = [0, 0], sizes = [16, 8], strides = [1, 1]} : vector<16x32xf32> to vector<16x8xf32>
    %99 = vector.extract_strided_slice %94 {offsets = [0, 0], sizes = [16, 8], strides = [1, 1]} : vector<16x32xf32> to vector<16x8xf32>
    %cst_49 = arith.constant dense<0.000000e+00> : vector<16x16xf32>
    %100 = tpu.matmul %97, %98, %cst_49 {dimension_numbers = #tpu.dot_dimension_numbers<[1], [1], [0], [0], [0, 0, 1, 0], [], []>} : vector<16x8xf32>, vector<16x8xf32>, vector<16x16xf32> -> vector<16x16xf32>
    %101 = arith.addf %100, %84 : vector<16x16xf32>
    %cst_50 = arith.constant dense<0xFF800000> : vector<16xf32>
    %102 = vector.multi_reduction <maximumf>, %101, %cst_50 [1] : vector<16x16xf32> to vector<16xf32>
    %103 = vector.shape_cast %102 : vector<16xf32> to vector<16x1xf32>
    %104 = vector.broadcast %103 : vector<16x1xf32> to vector<16x16xf32>
    %105 = arith.subf %101, %104 : vector<16x16xf32>
    %106 = math.exp %105 : vector<16x16xf32>
    %cst_51 = arith.constant dense<0.000000e+00> : vector<16xf32>
    %107 = vector.multi_reduction <add>, %106, %cst_51 [1] : vector<16x16xf32> to vector<16xf32>
    %108 = vector.shape_cast %107 : vector<16xf32> to vector<16x1xf32>
    %109 = tpu.reciprocal %108 : vector<16x1xf32> -> vector<16x1xf32>
    %cst_52 = arith.constant dense<0.000000e+00> : vector<16x8xf32>
    %110 = tpu.matmul %106, %99, %cst_52 {dimension_numbers = #tpu.dot_dimension_numbers<[1], [0], [0], [1], [0, 0, 1, 1], [], []>} : vector<16x16xf32>, vector<16x8xf32>, vector<16x8xf32> -> vector<16x8xf32>
    %111 = vector.broadcast %109 : vector<16x1xf32> to vector<16x8xf32>
    %112 = arith.mulf %110, %111 : vector<16x8xf32>
    %113 = vector.extract_strided_slice %95 {offsets = [0, 0], sizes = [8, 32], strides = [1, 1]} : vector<32x32xf32> to vector<8x32xf32>
    %cst_53 = arith.constant dense<0.000000e+00> : vector<16x32xf32>
    %114 = tpu.matmul %112, %113, %cst_53 {dimension_numbers = #tpu.dot_dimension_numbers<[1], [0], [0], [1], [0, 0, 1, 1], [], []>} : vector<16x8xf32>, vector<8x32xf32>, vector<16x32xf32> -> vector<16x32xf32>
    %115 = arith.addf %96, %114 : vector<16x32xf32>
    %116 = vector.extract_strided_slice %92 {offsets = [0, 8], sizes = [16, 8], strides = [1, 1]} : vector<16x32xf32> to vector<16x8xf32>
    %117 = vector.extract_strided_slice %93 {offsets = [0, 8], sizes = [16, 8], strides = [1, 1]} : vector<16x32xf32> to vector<16x8xf32>
    %118 = vector.extract_strided_slice %94 {offsets = [0, 8], sizes = [16, 8], strides = [1, 1]} : vector<16x32xf32> to vector<16x8xf32>
    %cst_54 = arith.constant dense<0.000000e+00> : vector<16x16xf32>
    %119 = tpu.matmul %116, %117, %cst_54 {dimension_numbers = #tpu.dot_dimension_numbers<[1], [1], [0], [0], [0, 0, 1, 0], [], []>} : vector<16x8xf32>, vector<16x8xf32>, vector<16x16xf32> -> vector<16x16xf32>
    %120 = arith.addf %119, %84 : vector<16x16xf32>
    %cst_55 = arith.constant dense<0xFF800000> : vector<16xf32>
    %121 = vector.multi_reduction <maximumf>, %120, %cst_55 [1] : vector<16x16xf32> to vector<16xf32>
    %122 = vector.shape_cast %121 : vector<16xf32> to vector<16x1xf32>
    %123 = vector.broadcast %122 : vector<16x1xf32> to vector<16x16xf32>
    %124 = arith.subf %120, %123 : vector<16x16xf32>
    %125 = math.exp %124 : vector<16x16xf32>
    %cst_56 = arith.constant dense<0.000000e+00> : vector<16xf32>
    %126 = vector.multi_reduction <add>, %125, %cst_56 [1] : vector<16x16xf32> to vector<16xf32>
    %127 = vector.shape_cast %126 : vector<16xf32> to vector<16x1xf32>
    %128 = tpu.reciprocal %127 : vector<16x1xf32> -> vector<16x1xf32>
    %cst_57 = arith.constant dense<0.000000e+00> : vector<16x8xf32>
    %129 = tpu.matmul %125, %118, %cst_57 {dimension_numbers = #tpu.dot_dimension_numbers<[1], [0], [0], [1], [0, 0, 1, 1], [], []>} : vector<16x16xf32>, vector<16x8xf32>, vector<16x8xf32> -> vector<16x8xf32>
    %130 = vector.broadcast %128 : vector<16x1xf32> to vector<16x8xf32>
    %131 = arith.mulf %129, %130 : vector<16x8xf32>
    %132 = vector.extract_strided_slice %95 {offsets = [8, 0], sizes = [8, 32], strides = [1, 1]} : vector<32x32xf32> to vector<8x32xf32>
    %cst_58 = arith.constant dense<0.000000e+00> : vector<16x32xf32>
    %133 = tpu.matmul %131, %132, %cst_58 {dimension_numbers = #tpu.dot_dimension_numbers<[1], [0], [0], [1], [0, 0, 1, 1], [], []>} : vector<16x8xf32>, vector<8x32xf32>, vector<16x32xf32> -> vector<16x32xf32>
    %134 = arith.addf %115, %133 : vector<16x32xf32>
    %135 = vector.extract_strided_slice %92 {offsets = [0, 16], sizes = [16, 8], strides = [1, 1]} : vector<16x32xf32> to vector<16x8xf32>
    %136 = vector.extract_strided_slice %93 {offsets = [0, 16], sizes = [16, 8], strides = [1, 1]} : vector<16x32xf32> to vector<16x8xf32>
    %137 = vector.extract_strided_slice %94 {offsets = [0, 16], sizes = [16, 8], strides = [1, 1]} : vector<16x32xf32> to vector<16x8xf32>
    %cst_59 = arith.constant dense<0.000000e+00> : vector<16x16xf32>
    %138 = tpu.matmul %135, %136, %cst_59 {dimension_numbers = #tpu.dot_dimension_numbers<[1], [1], [0], [0], [0, 0, 1, 0], [], []>} : vector<16x8xf32>, vector<16x8xf32>, vector<16x16xf32> -> vector<16x16xf32>
    %139 = arith.addf %138, %84 : vector<16x16xf32>
    %cst_60 = arith.constant dense<0xFF800000> : vector<16xf32>
    %140 = vector.multi_reduction <maximumf>, %139, %cst_60 [1] : vector<16x16xf32> to vector<16xf32>
    %141 = vector.shape_cast %140 : vector<16xf32> to vector<16x1xf32>
    %142 = vector.broadcast %141 : vector<16x1xf32> to vector<16x16xf32>
    %143 = arith.subf %139, %142 : vector<16x16xf32>
    %144 = math.exp %143 : vector<16x16xf32>
    %cst_61 = arith.constant dense<0.000000e+00> : vector<16xf32>
    %145 = vector.multi_reduction <add>, %144, %cst_61 [1] : vector<16x16xf32> to vector<16xf32>
    %146 = vector.shape_cast %145 : vector<16xf32> to vector<16x1xf32>
    %147 = tpu.reciprocal %146 : vector<16x1xf32> -> vector<16x1xf32>
    %cst_62 = arith.constant dense<0.000000e+00> : vector<16x8xf32>
    %148 = tpu.matmul %144, %137, %cst_62 {dimension_numbers = #tpu.dot_dimension_numbers<[1], [0], [0], [1], [0, 0, 1, 1], [], []>} : vector<16x16xf32>, vector<16x8xf32>, vector<16x8xf32> -> vector<16x8xf32>
    %149 = vector.broadcast %147 : vector<16x1xf32> to vector<16x8xf32>
    %150 = arith.mulf %148, %149 : vector<16x8xf32>
    %151 = vector.extract_strided_slice %95 {offsets = [16, 0], sizes = [8, 32], strides = [1, 1]} : vector<32x32xf32> to vector<8x32xf32>
    %cst_63 = arith.constant dense<0.000000e+00> : vector<16x32xf32>
    %152 = tpu.matmul %150, %151, %cst_63 {dimension_numbers = #tpu.dot_dimension_numbers<[1], [0], [0], [1], [0, 0, 1, 1], [], []>} : vector<16x8xf32>, vector<8x32xf32>, vector<16x32xf32> -> vector<16x32xf32>
    %153 = arith.addf %134, %152 : vector<16x32xf32>
    %154 = vector.extract_strided_slice %92 {offsets = [0, 24], sizes = [16, 8], strides = [1, 1]} : vector<16x32xf32> to vector<16x8xf32>
    %155 = vector.extract_strided_slice %93 {offsets = [0, 24], sizes = [16, 8], strides = [1, 1]} : vector<16x32xf32> to vector<16x8xf32>
    %156 = vector.extract_strided_slice %94 {offsets = [0, 24], sizes = [16, 8], strides = [1, 1]} : vector<16x32xf32> to vector<16x8xf32>
    %cst_64 = arith.constant dense<0.000000e+00> : vector<16x16xf32>
    %157 = tpu.matmul %154, %155, %cst_64 {dimension_numbers = #tpu.dot_dimension_numbers<[1], [1], [0], [0], [0, 0, 1, 0], [], []>} : vector<16x8xf32>, vector<16x8xf32>, vector<16x16xf32> -> vector<16x16xf32>
    %158 = arith.addf %157, %84 : vector<16x16xf32>
    %cst_65 = arith.constant dense<0xFF800000> : vector<16xf32>
    %159 = vector.multi_reduction <maximumf>, %158, %cst_65 [1] : vector<16x16xf32> to vector<16xf32>
    %160 = vector.shape_cast %159 : vector<16xf32> to vector<16x1xf32>
    %161 = vector.broadcast %160 : vector<16x1xf32> to vector<16x16xf32>
    %162 = arith.subf %158, %161 : vector<16x16xf32>
    %163 = math.exp %162 : vector<16x16xf32>
    %cst_66 = arith.constant dense<0.000000e+00> : vector<16xf32>
    %164 = vector.multi_reduction <add>, %163, %cst_66 [1] : vector<16x16xf32> to vector<16xf32>
    %165 = vector.shape_cast %164 : vector<16xf32> to vector<16x1xf32>
    %166 = tpu.reciprocal %165 : vector<16x1xf32> -> vector<16x1xf32>
    %cst_67 = arith.constant dense<0.000000e+00> : vector<16x8xf32>
    %167 = tpu.matmul %163, %156, %cst_67 {dimension_numbers = #tpu.dot_dimension_numbers<[1], [0], [0], [1], [0, 0, 1, 1], [], []>} : vector<16x16xf32>, vector<16x8xf32>, vector<16x8xf32> -> vector<16x8xf32>
    %168 = vector.broadcast %166 : vector<16x1xf32> to vector<16x8xf32>
    %169 = arith.mulf %167, %168 : vector<16x8xf32>
    %170 = vector.extract_strided_slice %95 {offsets = [24, 0], sizes = [8, 32], strides = [1, 1]} : vector<32x32xf32> to vector<8x32xf32>
    %cst_68 = arith.constant dense<0.000000e+00> : vector<16x32xf32>
    %171 = tpu.matmul %169, %170, %cst_68 {dimension_numbers = #tpu.dot_dimension_numbers<[1], [0], [0], [1], [0, 0, 1, 1], [], []>} : vector<16x8xf32>, vector<8x32xf32>, vector<16x32xf32> -> vector<16x32xf32>
    %172 = arith.addf %153, %171 : vector<16x32xf32>
    %c0_69 = arith.constant 0 : index
    %c0_70 = arith.constant 0 : index
    %173 = vector.load %arg14[%c0_69, %c0_70] : memref<1x32xf32, #tpu.memory_space<vmem>>, vector<1x32xf32>
    %174 = vector.broadcast %173 : vector<1x32xf32> to vector<16x32xf32>
    %175 = arith.addf %172, %174 : vector<16x32xf32>
    %176 = arith.addf %83, %175 : vector<16x32xf32>
    %c0_71 = arith.constant 0 : index
    %c0_72 = arith.constant 0 : index
    %177 = vector.load %arg15[%c0_71, %c0_72] : memref<1x32xf32, #tpu.memory_space<vmem>>, vector<1x32xf32>
    %c0_73 = arith.constant 0 : index
    %c0_74 = arith.constant 0 : index
    %178 = vector.load %arg16[%c0_73, %c0_74] : memref<1x32xf32, #tpu.memory_space<vmem>>, vector<1x32xf32>
    %cst_75 = arith.constant dense<0.000000e+00> : vector<16xf32>
    %179 = vector.multi_reduction <add>, %176, %cst_75 [1] : vector<16x32xf32> to vector<16xf32>
    %180 = vector.shape_cast %179 : vector<16xf32> to vector<16x1xf32>
    %cst_76 = arith.constant 3.200000e+01 : f32
    %181 = vector.broadcast %cst_76 : f32 to vector<16x1xf32>
    %182 = arith.divf %180, %181 : vector<16x1xf32>
    %183 = vector.broadcast %182 : vector<16x1xf32> to vector<16x32xf32>
    %184 = arith.subf %176, %183 : vector<16x32xf32>
    %185 = arith.mulf %184, %184 : vector<16x32xf32>
    %cst_77 = arith.constant dense<0.000000e+00> : vector<16xf32>
    %186 = vector.multi_reduction <add>, %185, %cst_77 [1] : vector<16x32xf32> to vector<16xf32>
    %187 = vector.shape_cast %186 : vector<16xf32> to vector<16x1xf32>
    %cst_78 = arith.constant 3.200000e+01 : f32
    %188 = vector.broadcast %cst_78 : f32 to vector<16x1xf32>
    %189 = arith.divf %187, %188 : vector<16x1xf32>
    %190 = vector.broadcast %182 : vector<16x1xf32> to vector<16x32xf32>
    %191 = arith.subf %176, %190 : vector<16x32xf32>
    %cst_79 = arith.constant 9.99999974E-6 : f32
    %192 = vector.broadcast %cst_79 : f32 to vector<16x1xf32>
    %193 = arith.addf %189, %192 : vector<16x1xf32>
    %194 = math.rsqrt %193 : vector<16x1xf32>
    %195 = vector.broadcast %194 : vector<16x1xf32> to vector<16x32xf32>
    %196 = arith.mulf %191, %195 : vector<16x32xf32>
    %197 = vector.broadcast %177 : vector<1x32xf32> to vector<16x32xf32>
    %198 = arith.mulf %196, %197 : vector<16x32xf32>
    %199 = vector.broadcast %178 : vector<1x32xf32> to vector<16x32xf32>
    %200 = arith.addf %198, %199 : vector<16x32xf32>
    %c0_80 = arith.constant 0 : index
    %c0_81 = arith.constant 0 : index
    %201 = vector.load %arg17[%c0_80, %c0_81] : memref<32x64xf32, #tpu.memory_space<vmem>>, vector<32x64xf32>
    %cst_82 = arith.constant dense<0.000000e+00> : vector<16x64xf32>
    %202 = tpu.matmul %200, %201, %cst_82 {dimension_numbers = #tpu.dot_dimension_numbers<[1], [0], [0], [1], [0, 0, 1, 1], [], []>} : vector<16x32xf32>, vector<32x64xf32>, vector<16x64xf32> -> vector<16x64xf32>
    %c0_83 = arith.constant 0 : index
    %c0_84 = arith.constant 0 : index
    %203 = vector.load %arg18[%c0_83, %c0_84] : memref<1x64xf32, #tpu.memory_space<vmem>>, vector<1x64xf32>
    %204 = vector.broadcast %203 : vector<1x64xf32> to vector<16x64xf32>
    %205 = arith.addf %202, %204 : vector<16x64xf32>
    %cst_85 = arith.constant 5.000000e-01 : f32
    %206 = vector.broadcast %cst_85 : f32 to vector<16x64xf32>
    %207 = arith.mulf %206, %205 : vector<16x64xf32>
    %208 = arith.mulf %205, %205 : vector<16x64xf32>
    %209 = arith.mulf %205, %208 : vector<16x64xf32>
    %cst_86 = arith.constant 4.471500e-02 : f32
    %210 = vector.broadcast %cst_86 : f32 to vector<16x64xf32>
    %211 = arith.mulf %210, %209 : vector<16x64xf32>
    %212 = arith.addf %205, %211 : vector<16x64xf32>
    %cst_87 = arith.constant 0.797884583 : f32
    %213 = vector.broadcast %cst_87 : f32 to vector<16x64xf32>
    %214 = arith.mulf %213, %212 : vector<16x64xf32>
    %215 = math.tanh %214 : vector<16x64xf32>
    %cst_88 = arith.constant 1.000000e+00 : f32
    %216 = vector.broadcast %cst_88 : f32 to vector<16x64xf32>
    %217 = arith.addf %216, %215 : vector<16x64xf32>
    %218 = arith.mulf %207, %217 : vector<16x64xf32>
    %c0_89 = arith.constant 0 : index
    %c0_90 = arith.constant 0 : index
    %219 = vector.load %arg19[%c0_89, %c0_90] : memref<64x32xf32, #tpu.memory_space<vmem>>, vector<64x32xf32>
    %cst_91 = arith.constant dense<0.000000e+00> : vector<16x32xf32>
    %220 = tpu.matmul %218, %219, %cst_91 {dimension_numbers = #tpu.dot_dimension_numbers<[1], [0], [0], [1], [0, 0, 1, 1], [], []>} : vector<16x64xf32>, vector<64x32xf32>, vector<16x32xf32> -> vector<16x32xf32>
    %c0_92 = arith.constant 0 : index
    %c0_93 = arith.constant 0 : index
    %221 = vector.load %arg20[%c0_92, %c0_93] : memref<1x32xf32, #tpu.memory_space<vmem>>, vector<1x32xf32>
    %222 = vector.broadcast %221 : vector<1x32xf32> to vector<16x32xf32>
    %223 = arith.addf %220, %222 : vector<16x32xf32>
    %224 = arith.addf %200, %223 : vector<16x32xf32>
    %c0_94 = arith.constant 0 : index
    %c0_95 = arith.constant 0 : index
    %225 = vector.load %arg21[%c0_94, %c0_95] : memref<1x32xf32, #tpu.memory_space<vmem>>, vector<1x32xf32>
    %c0_96 = arith.constant 0 : index
    %c0_97 = arith.constant 0 : index
    %226 = vector.load %arg22[%c0_96, %c0_97] : memref<1x32xf32, #tpu.memory_space<vmem>>, vector<1x32xf32>
    %cst_98 = arith.constant dense<0.000000e+00> : vector<16xf32>
    %227 = vector.multi_reduction <add>, %224, %cst_98 [1] : vector<16x32xf32> to vector<16xf32>
    %228 = vector.shape_cast %227 : vector<16xf32> to vector<16x1xf32>
    %cst_99 = arith.constant 3.200000e+01 : f32
    %229 = vector.broadcast %cst_99 : f32 to vector<16x1xf32>
    %230 = arith.divf %228, %229 : vector<16x1xf32>
    %231 = vector.broadcast %230 : vector<16x1xf32> to vector<16x32xf32>
    %232 = arith.subf %224, %231 : vector<16x32xf32>
    %233 = arith.mulf %232, %232 : vector<16x32xf32>
    %cst_100 = arith.constant dense<0.000000e+00> : vector<16xf32>
    %234 = vector.multi_reduction <add>, %233, %cst_100 [1] : vector<16x32xf32> to vector<16xf32>
    %235 = vector.shape_cast %234 : vector<16xf32> to vector<16x1xf32>
    %cst_101 = arith.constant 3.200000e+01 : f32
    %236 = vector.broadcast %cst_101 : f32 to vector<16x1xf32>
    %237 = arith.divf %235, %236 : vector<16x1xf32>
    %238 = vector.broadcast %230 : vector<16x1xf32> to vector<16x32xf32>
    %239 = arith.subf %224, %238 : vector<16x32xf32>
    %cst_102 = arith.constant 9.99999974E-6 : f32
    %240 = vector.broadcast %cst_102 : f32 to vector<16x1xf32>
    %241 = arith.addf %237, %240 : vector<16x1xf32>
    %242 = math.rsqrt %241 : vector<16x1xf32>
    %243 = vector.broadcast %242 : vector<16x1xf32> to vector<16x32xf32>
    %244 = arith.mulf %239, %243 : vector<16x32xf32>
    %245 = vector.broadcast %225 : vector<1x32xf32> to vector<16x32xf32>
    %246 = arith.mulf %244, %245 : vector<16x32xf32>
    %247 = vector.broadcast %226 : vector<1x32xf32> to vector<16x32xf32>
    %248 = arith.addf %246, %247 : vector<16x32xf32>
    %c0_103 = arith.constant 0 : index
    %c0_104 = arith.constant 0 : index
    %249 = vector.load %arg23[%c0_103, %c0_104] : memref<32x96xf32, #tpu.memory_space<vmem>>, vector<32x96xf32>
    %cst_105 = arith.constant dense<0.000000e+00> : vector<16x96xf32>
    %250 = tpu.matmul %248, %249, %cst_105 {dimension_numbers = #tpu.dot_dimension_numbers<[1], [0], [0], [1], [0, 0, 1, 1], [], []>} : vector<16x32xf32>, vector<32x96xf32>, vector<16x96xf32> -> vector<16x96xf32>
    %c0_106 = arith.constant 0 : index
    %c0_107 = arith.constant 0 : index
    %251 = vector.load %arg24[%c0_106, %c0_107] : memref<1x96xf32, #tpu.memory_space<vmem>>, vector<1x96xf32>
    %252 = vector.broadcast %251 : vector<1x96xf32> to vector<16x96xf32>
    %253 = arith.addf %250, %252 : vector<16x96xf32>
    %254 = vector.extract_strided_slice %253 {offsets = [0, 0], sizes = [16, 32], strides = [1, 1]} : vector<16x96xf32> to vector<16x32xf32>
    %cst_108 = arith.constant 0.353553385 : f32
    %255 = vector.broadcast %cst_108 : f32 to vector<16x32xf32>
    %256 = arith.mulf %254, %255 : vector<16x32xf32>
    %257 = vector.extract_strided_slice %253 {offsets = [0, 32], sizes = [16, 32], strides = [1, 1]} : vector<16x96xf32> to vector<16x32xf32>
    %258 = vector.extract_strided_slice %253 {offsets = [0, 64], sizes = [16, 32], strides = [1, 1]} : vector<16x96xf32> to vector<16x32xf32>
    %c0_109 = arith.constant 0 : index
    %c0_110 = arith.constant 0 : index
    %259 = vector.load %arg25[%c0_109, %c0_110] : memref<32x32xf32, #tpu.memory_space<vmem>>, vector<32x32xf32>
    %cst_111 = arith.constant 0.000000e+00 : f32
    %260 = vector.broadcast %cst_111 : f32 to vector<16x32xf32>
    %261 = vector.extract_strided_slice %256 {offsets = [0, 0], sizes = [16, 8], strides = [1, 1]} : vector<16x32xf32> to vector<16x8xf32>
    %262 = vector.extract_strided_slice %257 {offsets = [0, 0], sizes = [16, 8], strides = [1, 1]} : vector<16x32xf32> to vector<16x8xf32>
    %263 = vector.extract_strided_slice %258 {offsets = [0, 0], sizes = [16, 8], strides = [1, 1]} : vector<16x32xf32> to vector<16x8xf32>
    %cst_112 = arith.constant dense<0.000000e+00> : vector<16x16xf32>
    %264 = tpu.matmul %261, %262, %cst_112 {dimension_numbers = #tpu.dot_dimension_numbers<[1], [1], [0], [0], [0, 0, 1, 0], [], []>} : vector<16x8xf32>, vector<16x8xf32>, vector<16x16xf32> -> vector<16x16xf32>
    %265 = arith.addf %264, %84 : vector<16x16xf32>
    %cst_113 = arith.constant dense<0xFF800000> : vector<16xf32>
    %266 = vector.multi_reduction <maximumf>, %265, %cst_113 [1] : vector<16x16xf32> to vector<16xf32>
    %267 = vector.shape_cast %266 : vector<16xf32> to vector<16x1xf32>
    %268 = vector.broadcast %267 : vector<16x1xf32> to vector<16x16xf32>
    %269 = arith.subf %265, %268 : vector<16x16xf32>
    %270 = math.exp %269 : vector<16x16xf32>
    %cst_114 = arith.constant dense<0.000000e+00> : vector<16xf32>
    %271 = vector.multi_reduction <add>, %270, %cst_114 [1] : vector<16x16xf32> to vector<16xf32>
    %272 = vector.shape_cast %271 : vector<16xf32> to vector<16x1xf32>
    %273 = tpu.reciprocal %272 : vector<16x1xf32> -> vector<16x1xf32>
    %cst_115 = arith.constant dense<0.000000e+00> : vector<16x8xf32>
    %274 = tpu.matmul %270, %263, %cst_115 {dimension_numbers = #tpu.dot_dimension_numbers<[1], [0], [0], [1], [0, 0, 1, 1], [], []>} : vector<16x16xf32>, vector<16x8xf32>, vector<16x8xf32> -> vector<16x8xf32>
    %275 = vector.broadcast %273 : vector<16x1xf32> to vector<16x8xf32>
    %276 = arith.mulf %274, %275 : vector<16x8xf32>
    %277 = vector.extract_strided_slice %259 {offsets = [0, 0], sizes = [8, 32], strides = [1, 1]} : vector<32x32xf32> to vector<8x32xf32>
    %cst_116 = arith.constant dense<0.000000e+00> : vector<16x32xf32>
    %278 = tpu.matmul %276, %277, %cst_116 {dimension_numbers = #tpu.dot_dimension_numbers<[1], [0], [0], [1], [0, 0, 1, 1], [], []>} : vector<16x8xf32>, vector<8x32xf32>, vector<16x32xf32> -> vector<16x32xf32>
    %279 = arith.addf %260, %278 : vector<16x32xf32>
    %280 = vector.extract_strided_slice %256 {offsets = [0, 8], sizes = [16, 8], strides = [1, 1]} : vector<16x32xf32> to vector<16x8xf32>
    %281 = vector.extract_strided_slice %257 {offsets = [0, 8], sizes = [16, 8], strides = [1, 1]} : vector<16x32xf32> to vector<16x8xf32>
    %282 = vector.extract_strided_slice %258 {offsets = [0, 8], sizes = [16, 8], strides = [1, 1]} : vector<16x32xf32> to vector<16x8xf32>
    %cst_117 = arith.constant dense<0.000000e+00> : vector<16x16xf32>
    %283 = tpu.matmul %280, %281, %cst_117 {dimension_numbers = #tpu.dot_dimension_numbers<[1], [1], [0], [0], [0, 0, 1, 0], [], []>} : vector<16x8xf32>, vector<16x8xf32>, vector<16x16xf32> -> vector<16x16xf32>
    %284 = arith.addf %283, %84 : vector<16x16xf32>
    %cst_118 = arith.constant dense<0xFF800000> : vector<16xf32>
    %285 = vector.multi_reduction <maximumf>, %284, %cst_118 [1] : vector<16x16xf32> to vector<16xf32>
    %286 = vector.shape_cast %285 : vector<16xf32> to vector<16x1xf32>
    %287 = vector.broadcast %286 : vector<16x1xf32> to vector<16x16xf32>
    %288 = arith.subf %284, %287 : vector<16x16xf32>
    %289 = math.exp %288 : vector<16x16xf32>
    %cst_119 = arith.constant dense<0.000000e+00> : vector<16xf32>
    %290 = vector.multi_reduction <add>, %289, %cst_119 [1] : vector<16x16xf32> to vector<16xf32>
    %291 = vector.shape_cast %290 : vector<16xf32> to vector<16x1xf32>
    %292 = tpu.reciprocal %291 : vector<16x1xf32> -> vector<16x1xf32>
    %cst_120 = arith.constant dense<0.000000e+00> : vector<16x8xf32>
    %293 = tpu.matmul %289, %282, %cst_120 {dimension_numbers = #tpu.dot_dimension_numbers<[1], [0], [0], [1], [0, 0, 1, 1], [], []>} : vector<16x16xf32>, vector<16x8xf32>, vector<16x8xf32> -> vector<16x8xf32>
    %294 = vector.broadcast %292 : vector<16x1xf32> to vector<16x8xf32>
    %295 = arith.mulf %293, %294 : vector<16x8xf32>
    %296 = vector.extract_strided_slice %259 {offsets = [8, 0], sizes = [8, 32], strides = [1, 1]} : vector<32x32xf32> to vector<8x32xf32>
    %cst_121 = arith.constant dense<0.000000e+00> : vector<16x32xf32>
    %297 = tpu.matmul %295, %296, %cst_121 {dimension_numbers = #tpu.dot_dimension_numbers<[1], [0], [0], [1], [0, 0, 1, 1], [], []>} : vector<16x8xf32>, vector<8x32xf32>, vector<16x32xf32> -> vector<16x32xf32>
    %298 = arith.addf %279, %297 : vector<16x32xf32>
    %299 = vector.extract_strided_slice %256 {offsets = [0, 16], sizes = [16, 8], strides = [1, 1]} : vector<16x32xf32> to vector<16x8xf32>
    %300 = vector.extract_strided_slice %257 {offsets = [0, 16], sizes = [16, 8], strides = [1, 1]} : vector<16x32xf32> to vector<16x8xf32>
    %301 = vector.extract_strided_slice %258 {offsets = [0, 16], sizes = [16, 8], strides = [1, 1]} : vector<16x32xf32> to vector<16x8xf32>
    %cst_122 = arith.constant dense<0.000000e+00> : vector<16x16xf32>
    %302 = tpu.matmul %299, %300, %cst_122 {dimension_numbers = #tpu.dot_dimension_numbers<[1], [1], [0], [0], [0, 0, 1, 0], [], []>} : vector<16x8xf32>, vector<16x8xf32>, vector<16x16xf32> -> vector<16x16xf32>
    %303 = arith.addf %302, %84 : vector<16x16xf32>
    %cst_123 = arith.constant dense<0xFF800000> : vector<16xf32>
    %304 = vector.multi_reduction <maximumf>, %303, %cst_123 [1] : vector<16x16xf32> to vector<16xf32>
    %305 = vector.shape_cast %304 : vector<16xf32> to vector<16x1xf32>
    %306 = vector.broadcast %305 : vector<16x1xf32> to vector<16x16xf32>
    %307 = arith.subf %303, %306 : vector<16x16xf32>
    %308 = math.exp %307 : vector<16x16xf32>
    %cst_124 = arith.constant dense<0.000000e+00> : vector<16xf32>
    %309 = vector.multi_reduction <add>, %308, %cst_124 [1] : vector<16x16xf32> to vector<16xf32>
    %310 = vector.shape_cast %309 : vector<16xf32> to vector<16x1xf32>
    %311 = tpu.reciprocal %310 : vector<16x1xf32> -> vector<16x1xf32>
    %cst_125 = arith.constant dense<0.000000e+00> : vector<16x8xf32>
    %312 = tpu.matmul %308, %301, %cst_125 {dimension_numbers = #tpu.dot_dimension_numbers<[1], [0], [0], [1], [0, 0, 1, 1], [], []>} : vector<16x16xf32>, vector<16x8xf32>, vector<16x8xf32> -> vector<16x8xf32>
    %313 = vector.broadcast %311 : vector<16x1xf32> to vector<16x8xf32>
    %314 = arith.mulf %312, %313 : vector<16x8xf32>
    %315 = vector.extract_strided_slice %259 {offsets = [16, 0], sizes = [8, 32], strides = [1, 1]} : vector<32x32xf32> to vector<8x32xf32>
    %cst_126 = arith.constant dense<0.000000e+00> : vector<16x32xf32>
    %316 = tpu.matmul %314, %315, %cst_126 {dimension_numbers = #tpu.dot_dimension_numbers<[1], [0], [0], [1], [0, 0, 1, 1], [], []>} : vector<16x8xf32>, vector<8x32xf32>, vector<16x32xf32> -> vector<16x32xf32>
    %317 = arith.addf %298, %316 : vector<16x32xf32>
    %318 = vector.extract_strided_slice %256 {offsets = [0, 24], sizes = [16, 8], strides = [1, 1]} : vector<16x32xf32> to vector<16x8xf32>
    %319 = vector.extract_strided_slice %257 {offsets = [0, 24], sizes = [16, 8], strides = [1, 1]} : vector<16x32xf32> to vector<16x8xf32>
    %320 = vector.extract_strided_slice %258 {offsets = [0, 24], sizes = [16, 8], strides = [1, 1]} : vector<16x32xf32> to vector<16x8xf32>
    %cst_127 = arith.constant dense<0.000000e+00> : vector<16x16xf32>
    %321 = tpu.matmul %318, %319, %cst_127 {dimension_numbers = #tpu.dot_dimension_numbers<[1], [1], [0], [0], [0, 0, 1, 0], [], []>} : vector<16x8xf32>, vector<16x8xf32>, vector<16x16xf32> -> vector<16x16xf32>
    %322 = arith.addf %321, %84 : vector<16x16xf32>
    %cst_128 = arith.constant dense<0xFF800000> : vector<16xf32>
    %323 = vector.multi_reduction <maximumf>, %322, %cst_128 [1] : vector<16x16xf32> to vector<16xf32>
    %324 = vector.shape_cast %323 : vector<16xf32> to vector<16x1xf32>
    %325 = vector.broadcast %324 : vector<16x1xf32> to vector<16x16xf32>
    %326 = arith.subf %322, %325 : vector<16x16xf32>
    %327 = math.exp %326 : vector<16x16xf32>
    %cst_129 = arith.constant dense<0.000000e+00> : vector<16xf32>
    %328 = vector.multi_reduction <add>, %327, %cst_129 [1] : vector<16x16xf32> to vector<16xf32>
    %329 = vector.shape_cast %328 : vector<16xf32> to vector<16x1xf32>
    %330 = tpu.reciprocal %329 : vector<16x1xf32> -> vector<16x1xf32>
    %cst_130 = arith.constant dense<0.000000e+00> : vector<16x8xf32>
    %331 = tpu.matmul %327, %320, %cst_130 {dimension_numbers = #tpu.dot_dimension_numbers<[1], [0], [0], [1], [0, 0, 1, 1], [], []>} : vector<16x16xf32>, vector<16x8xf32>, vector<16x8xf32> -> vector<16x8xf32>
    %332 = vector.broadcast %330 : vector<16x1xf32> to vector<16x8xf32>
    %333 = arith.mulf %331, %332 : vector<16x8xf32>
    %334 = vector.extract_strided_slice %259 {offsets = [24, 0], sizes = [8, 32], strides = [1, 1]} : vector<32x32xf32> to vector<8x32xf32>
    %cst_131 = arith.constant dense<0.000000e+00> : vector<16x32xf32>
    %335 = tpu.matmul %333, %334, %cst_131 {dimension_numbers = #tpu.dot_dimension_numbers<[1], [0], [0], [1], [0, 0, 1, 1], [], []>} : vector<16x8xf32>, vector<8x32xf32>, vector<16x32xf32> -> vector<16x32xf32>
    %336 = arith.addf %317, %335 : vector<16x32xf32>
    %c0_132 = arith.constant 0 : index
    %c0_133 = arith.constant 0 : index
    %337 = vector.load %arg26[%c0_132, %c0_133] : memref<1x32xf32, #tpu.memory_space<vmem>>, vector<1x32xf32>
    %338 = vector.broadcast %337 : vector<1x32xf32> to vector<16x32xf32>
    %339 = arith.addf %336, %338 : vector<16x32xf32>
    %340 = arith.addf %248, %339 : vector<16x32xf32>
    %c0_134 = arith.constant 0 : index
    %c0_135 = arith.constant 0 : index
    %341 = vector.load %arg27[%c0_134, %c0_135] : memref<1x32xf32, #tpu.memory_space<vmem>>, vector<1x32xf32>
    %c0_136 = arith.constant 0 : index
    %c0_137 = arith.constant 0 : index
    %342 = vector.load %arg28[%c0_136, %c0_137] : memref<1x32xf32, #tpu.memory_space<vmem>>, vector<1x32xf32>
    %cst_138 = arith.constant dense<0.000000e+00> : vector<16xf32>
    %343 = vector.multi_reduction <add>, %340, %cst_138 [1] : vector<16x32xf32> to vector<16xf32>
    %344 = vector.shape_cast %343 : vector<16xf32> to vector<16x1xf32>
    %cst_139 = arith.constant 3.200000e+01 : f32
    %345 = vector.broadcast %cst_139 : f32 to vector<16x1xf32>
    %346 = arith.divf %344, %345 : vector<16x1xf32>
    %347 = vector.broadcast %346 : vector<16x1xf32> to vector<16x32xf32>
    %348 = arith.subf %340, %347 : vector<16x32xf32>
    %349 = arith.mulf %348, %348 : vector<16x32xf32>
    %cst_140 = arith.constant dense<0.000000e+00> : vector<16xf32>
    %350 = vector.multi_reduction <add>, %349, %cst_140 [1] : vector<16x32xf32> to vector<16xf32>
    %351 = vector.shape_cast %350 : vector<16xf32> to vector<16x1xf32>
    %cst_141 = arith.constant 3.200000e+01 : f32
    %352 = vector.broadcast %cst_141 : f32 to vector<16x1xf32>
    %353 = arith.divf %351, %352 : vector<16x1xf32>
    %354 = vector.broadcast %346 : vector<16x1xf32> to vector<16x32xf32>
    %355 = arith.subf %340, %354 : vector<16x32xf32>
    %cst_142 = arith.constant 9.99999974E-6 : f32
    %356 = vector.broadcast %cst_142 : f32 to vector<16x1xf32>
    %357 = arith.addf %353, %356 : vector<16x1xf32>
    %358 = math.rsqrt %357 : vector<16x1xf32>
    %359 = vector.broadcast %358 : vector<16x1xf32> to vector<16x32xf32>
    %360 = arith.mulf %355, %359 : vector<16x32xf32>
    %361 = vector.broadcast %341 : vector<1x32xf32> to vector<16x32xf32>
    %362 = arith.mulf %360, %361 : vector<16x32xf32>
    %363 = vector.broadcast %342 : vector<1x32xf32> to vector<16x32xf32>
    %364 = arith.addf %362, %363 : vector<16x32xf32>
    %c0_143 = arith.constant 0 : index
    %c0_144 = arith.constant 0 : index
    %365 = vector.load %arg29[%c0_143, %c0_144] : memref<32x64xf32, #tpu.memory_space<vmem>>, vector<32x64xf32>
    %cst_145 = arith.constant dense<0.000000e+00> : vector<16x64xf32>
    %366 = tpu.matmul %364, %365, %cst_145 {dimension_numbers = #tpu.dot_dimension_numbers<[1], [0], [0], [1], [0, 0, 1, 1], [], []>} : vector<16x32xf32>, vector<32x64xf32>, vector<16x64xf32> -> vector<16x64xf32>
    %c0_146 = arith.constant 0 : index
    %c0_147 = arith.constant 0 : index
    %367 = vector.load %arg30[%c0_146, %c0_147] : memref<1x64xf32, #tpu.memory_space<vmem>>, vector<1x64xf32>
    %368 = vector.broadcast %367 : vector<1x64xf32> to vector<16x64xf32>
    %369 = arith.addf %366, %368 : vector<16x64xf32>
    %cst_148 = arith.constant 5.000000e-01 : f32
    %370 = vector.broadcast %cst_148 : f32 to vector<16x64xf32>
    %371 = arith.mulf %370, %369 : vector<16x64xf32>
    %372 = arith.mulf %369, %369 : vector<16x64xf32>
    %373 = arith.mulf %369, %372 : vector<16x64xf32>
    %cst_149 = arith.constant 4.471500e-02 : f32
    %374 = vector.broadcast %cst_149 : f32 to vector<16x64xf32>
    %375 = arith.mulf %374, %373 : vector<16x64xf32>
    %376 = arith.addf %369, %375 : vector<16x64xf32>
    %cst_150 = arith.constant 0.797884583 : f32
    %377 = vector.broadcast %cst_150 : f32 to vector<16x64xf32>
    %378 = arith.mulf %377, %376 : vector<16x64xf32>
    %379 = math.tanh %378 : vector<16x64xf32>
    %cst_151 = arith.constant 1.000000e+00 : f32
    %380 = vector.broadcast %cst_151 : f32 to vector<16x64xf32>
    %381 = arith.addf %380, %379 : vector<16x64xf32>
    %382 = arith.mulf %371, %381 : vector<16x64xf32>
    %c0_152 = arith.constant 0 : index
    %c0_153 = arith.constant 0 : index
    %383 = vector.load %arg31[%c0_152, %c0_153] : memref<64x32xf32, #tpu.memory_space<vmem>>, vector<64x32xf32>
    %cst_154 = arith.constant dense<0.000000e+00> : vector<16x32xf32>
    %384 = tpu.matmul %382, %383, %cst_154 {dimension_numbers = #tpu.dot_dimension_numbers<[1], [0], [0], [1], [0, 0, 1, 1], [], []>} : vector<16x64xf32>, vector<64x32xf32>, vector<16x32xf32> -> vector<16x32xf32>
    %c0_155 = arith.constant 0 : index
    %c0_156 = arith.constant 0 : index
    %385 = vector.load %arg32[%c0_155, %c0_156] : memref<1x32xf32, #tpu.memory_space<vmem>>, vector<1x32xf32>
    %386 = vector.broadcast %385 : vector<1x32xf32> to vector<16x32xf32>
    %387 = arith.addf %384, %386 : vector<16x32xf32>
    %388 = arith.addf %364, %387 : vector<16x32xf32>
    %c0_157 = arith.constant 0 : index
    %c0_158 = arith.constant 0 : index
    %389 = vector.load %arg33[%c0_157, %c0_158] : memref<1x32xf32, #tpu.memory_space<vmem>>, vector<1x32xf32>
    %c0_159 = arith.constant 0 : index
    %c0_160 = arith.constant 0 : index
    %390 = vector.load %arg34[%c0_159, %c0_160] : memref<1x32xf32, #tpu.memory_space<vmem>>, vector<1x32xf32>
    %cst_161 = arith.constant dense<0.000000e+00> : vector<16xf32>
    %391 = vector.multi_reduction <add>, %388, %cst_161 [1] : vector<16x32xf32> to vector<16xf32>
    %392 = vector.shape_cast %391 : vector<16xf32> to vector<16x1xf32>
    %cst_162 = arith.constant 3.200000e+01 : f32
    %393 = vector.broadcast %cst_162 : f32 to vector<16x1xf32>
    %394 = arith.divf %392, %393 : vector<16x1xf32>
    %395 = vector.broadcast %394 : vector<16x1xf32> to vector<16x32xf32>
    %396 = arith.subf %388, %395 : vector<16x32xf32>
    %397 = arith.mulf %396, %396 : vector<16x32xf32>
    %cst_163 = arith.constant dense<0.000000e+00> : vector<16xf32>
    %398 = vector.multi_reduction <add>, %397, %cst_163 [1] : vector<16x32xf32> to vector<16xf32>
    %399 = vector.shape_cast %398 : vector<16xf32> to vector<16x1xf32>
    %cst_164 = arith.constant 3.200000e+01 : f32
    %400 = vector.broadcast %cst_164 : f32 to vector<16x1xf32>
    %401 = arith.divf %399, %400 : vector<16x1xf32>
    %402 = vector.broadcast %394 : vector<16x1xf32> to vector<16x32xf32>
    %403 = arith.subf %388, %402 : vector<16x32xf32>
    %cst_165 = arith.constant 9.99999974E-6 : f32
    %404 = vector.broadcast %cst_165 : f32 to vector<16x1xf32>
    %405 = arith.addf %401, %404 : vector<16x1xf32>
    %406 = math.rsqrt %405 : vector<16x1xf32>
    %407 = vector.broadcast %406 : vector<16x1xf32> to vector<16x32xf32>
    %408 = arith.mulf %403, %407 : vector<16x32xf32>
    %409 = vector.broadcast %389 : vector<1x32xf32> to vector<16x32xf32>
    %410 = arith.mulf %408, %409 : vector<16x32xf32>
    %411 = vector.broadcast %390 : vector<1x32xf32> to vector<16x32xf32>
    %412 = arith.addf %410, %411 : vector<16x32xf32>
    %c0_166 = arith.constant 0 : index
    %c0_167 = arith.constant 0 : index
    %413 = vector.load %arg35[%c0_166, %c0_167] : memref<16x32xf32, #tpu.memory_space<vmem>>, vector<16x32xf32>
    tpu.vector_store %arg35[%c0_166, %c0_167], %412 {strides = array<i32>} : memref<16x32xf32, #tpu.memory_space<vmem>>, vector<16x32xf32>,
    return
  }
}

</mosaic_0001>

<llo_original>
// kernel: forward_pallas.1
$region0: #{forward_pallas.1}
  #allocation0 [shape = 'u32[]', space=smem, size = 0x4, offset = 0x4, fixed_abs, tag = 'smem constant byte address 0x4 - core index']
  #allocation1 [shape = 'u32[72,128]{1,0:T(1,128)}', space=vmem, size = 0x9000, scoped, tag = 'internal scratch']
  %s0 = inlined_call_operand.smem [shape: u32[36], index: -1, kind: input, shape index: {}]
  %s1 = sld [smem:[%s0]]
  %s2 = scalar_lea.smem %s0, 1
  %s3 = sld [smem:[%s2]]
  %s4 = scalar_lea.smem %s0, 2
  %s5 = sld [smem:[%s4]]
  %s6 = scalar_lea.smem %s0, 3
  %s7 = sld [smem:[%s6]]
  %s8 = scalar_lea.smem %s0, 4
  %s9 = sld [smem:[%s8]]
  %s10 = scalar_lea.smem %s0, 5
  %s11 = sld [smem:[%s10]]
  %s12 = scalar_lea.smem %s0, 6
  %s13 = sld [smem:[%s12]]
  %s14 = scalar_lea.smem %s0, 7
  %s15 = sld [smem:[%s14]]
  %s16 = scalar_lea.smem %s0, 8
  %s17 = sld [smem:[%s16]]
  %s18 = scalar_lea.smem %s0, 9
  %s19 = sld [smem:[%s18]]
  %s20 = scalar_lea.smem %s0, 10
  %s21 = sld [smem:[%s20]]
  %s22 = scalar_lea.smem %s0, 11
  %s23 = sld [smem:[%s22]]
  %s24 = scalar_lea.smem %s0, 12
  %s25 = sld [smem:[%s24]]
  %s26 = scalar_lea.smem %s0, 13
  %s27 = sld [smem:[%s26]]
  %s28 = scalar_lea.smem %s0, 14
  %s29 = sld [smem:[%s28]]
  %s30 = scalar_lea.smem %s0, 15
  %s31 = sld [smem:[%s30]]
  %s32 = scalar_lea.smem %s0, 16
  %s33 = sld [smem:[%s32]]
  %s34 = scalar_lea.smem %s0, 17
  %s35 = sld [smem:[%s34]]
  %s36 = scalar_lea.smem %s0, 18
  %s37 = sld [smem:[%s36]]
  %s38 = scalar_lea.smem %s0, 19
  %s39 = sld [smem:[%s38]]
  %s40 = scalar_lea.smem %s0, 20
  %s41 = sld [smem:[%s40]]
  %s42 = scalar_lea.smem %s0, 21
  %s43 = sld [smem:[%s42]]
  %s44 = scalar_lea.smem %s0, 22
  %s45 = sld [smem:[%s44]]
  %s46 = scalar_lea.smem %s0, 23
  %s47 = sld [smem:[%s46]]
  %s48 = scalar_lea.smem %s0, 24
  %s49 = sld [smem:[%s48]]
  %s50 = scalar_lea.smem %s0, 25
  %s51 = sld [smem:[%s50]]
  %s52 = scalar_lea.smem %s0, 26
  %s53 = sld [smem:[%s52]]
  %s54 = scalar_lea.smem %s0, 27
  %s55 = sld [smem:[%s54]]
  %s56 = scalar_lea.smem %s0, 28
  %s57 = sld [smem:[%s56]]
  %s58 = scalar_lea.smem %s0, 29
  %s59 = sld [smem:[%s58]]
  %s60 = scalar_lea.smem %s0, 30
  %s61 = sld [smem:[%s60]]
  %s62 = scalar_lea.smem %s0, 31
  %s63 = sld [smem:[%s62]]
  %s64 = scalar_lea.smem %s0, 32
  %s65 = sld [smem:[%s64]]
  %s66 = scalar_lea.smem %s0, 33
  %s67 = sld [smem:[%s66]]
  %s68 = scalar_lea.smem %s0, 34
  %s69 = sld [smem:[%s68]]
  %s70 = scalar_lea.smem %s0, 35
  %s71 = sld [smem:[%s70]]
  %s72 = sld [smem:[#allocation0]]
  $region150: #{forward_pallas.1} parent=0
    _
  %s74 = ssub.s32 1, %s72
  %s75 = scalar_select 0, %s74, %s72
  $region1: #{forward_pallas.1} parent=0
    #allocation2 [shape = 'u8[8192]{0}', space=vmem, size = 0x2000, scoped, tag = 'output window, operand 0, single buffered']
    #allocation3 [shape = 's32[1]{0}', space=sflag, size = 0x4, scoped, tag = 'scoped memory for forward_pallas.1']
    %76 = vsyncpa [#allocation3], 0
    // Predicated region
    $region2: #{forward_pallas.1} parent=1 // pred_check
      _
    $region3: #{forward_pallas.1} parent=1 // pred_check_branch
      %78 = sbr.rel (0) target = $region5
    $region4: #{forward_pallas.1} parent=1 // pred_region
      _
    $region5: #{forward_pallas.1} parent=1 // pred_fallthru
      _
    // Predicated region
    $region6: #{forward_pallas.1} parent=1 // pred_check
      _
    $region7: #{forward_pallas.1} parent=1 // pred_check_branch
      %80 = sbr.rel (0) target = $region9
    $region8: #{forward_pallas.1} parent=1 // pred_region
      _
    $region9: #{forward_pallas.1} parent=1 // pred_fallthru
      _
    // Predicated region
    $region10: #{forward_pallas.1} parent=1 // pred_check
      _
    $region11: #{forward_pallas.1} parent=1 // pred_check_branch
      %82 = sbr.rel (0) target = $region13
    $region12: #{forward_pallas.1} parent=1 // pred_region
      _
    $region13: #{forward_pallas.1} parent=1 // pred_fallthru
      _
    // Predicated region
    $region14: #{forward_pallas.1} parent=1 // pred_check
      _
    $region15: #{forward_pallas.1} parent=1 // pred_check_branch
      %84 = sbr.rel (0) target = $region17
    $region16: #{forward_pallas.1} parent=1 // pred_region
      _
    $region17: #{forward_pallas.1} parent=1 // pred_fallthru
      _
    // Predicated region
    $region18: #{forward_pallas.1} parent=1 // pred_check
      _
    $region19: #{forward_pallas.1} parent=1 // pred_check_branch
      %86 = sbr.rel (0) target = $region21
    $region20: #{forward_pallas.1} parent=1 // pred_region
      _
    $region21: #{forward_pallas.1} parent=1 // pred_fallthru
      _
    // Predicated region
    $region22: #{forward_pallas.1} parent=1 // pred_check
      _
    $region23: #{forward_pallas.1} parent=1 // pred_check_branch
      %88 = sbr.rel (0) target = $region25
    $region24: #{forward_pallas.1} parent=1 // pred_region
      _
    $region25: #{forward_pallas.1} parent=1 // pred_fallthru
      _
    // Predicated region
    $region26: #{forward_pallas.1} parent=1 // pred_check
      _
    $region27: #{forward_pallas.1} parent=1 // pred_check_branch
      %90 = sbr.rel (0) target = $region29
    $region28: #{forward_pallas.1} parent=1 // pred_region
      _
    $region29: #{forward_pallas.1} parent=1 // pred_fallthru
      _
    // Predicated region
    $region30: #{forward_pallas.1} parent=1 // pred_check
      _
    $region31: #{forward_pallas.1} parent=1 // pred_check_branch
      %92 = sbr.rel (0) target = $region33
    $region32: #{forward_pallas.1} parent=1 // pred_region
      _
    $region33: #{forward_pallas.1} parent=1 // pred_fallthru
      _
    // Predicated region
    $region34: #{forward_pallas.1} parent=1 // pred_check
      _
    $region35: #{forward_pallas.1} parent=1 // pred_check_branch
      %94 = sbr.rel (0) target = $region37
    $region36: #{forward_pallas.1} parent=1 // pred_region
      _
    $region37: #{forward_pallas.1} parent=1 // pred_fallthru
      _
    // Predicated region
    $region38: #{forward_pallas.1} parent=1 // pred_check
      _
    $region39: #{forward_pallas.1} parent=1 // pred_check_branch
      %96 = sbr.rel (0) target = $region41
    $region40: #{forward_pallas.1} parent=1 // pred_region
      _
    $region41: #{forward_pallas.1} parent=1 // pred_fallthru
      _
    // Predicated region
    $region42: #{forward_pallas.1} parent=1 // pred_check
      _
    $region43: #{forward_pallas.1} parent=1 // pred_check_branch
      %98 = sbr.rel (0) target = $region45
    $region44: #{forward_pallas.1} parent=1 // pred_region
      _
    $region45: #{forward_pallas.1} parent=1 // pred_fallthru
      _
    // Predicated region
    $region46: #{forward_pallas.1} parent=1 // pred_check
      _
    $region47: #{forward_pallas.1} parent=1 // pred_check_branch
      %100 = sbr.rel (0) target = $region49
    $region48: #{forward_pallas.1} parent=1 // pred_region
      _
    $region49: #{forward_pallas.1} parent=1 // pred_fallthru
      _
    // Predicated region
    $region50: #{forward_pallas.1} parent=1 // pred_check
      _
    $region51: #{forward_pallas.1} parent=1 // pred_check_branch
      %102 = sbr.rel (0) target = $region53
    $region52: #{forward_pallas.1} parent=1 // pred_region
      _
    $region53: #{forward_pallas.1} parent=1 // pred_fallthru
      _
    // Predicated region
    $region54: #{forward_pallas.1} parent=1 // pred_check
      _
    $region55: #{forward_pallas.1} parent=1 // pred_check_branch
      %104 = sbr.rel (0) target = $region57
    $region56: #{forward_pallas.1} parent=1 // pred_region
      _
    $region57: #{forward_pallas.1} parent=1 // pred_fallthru
      _
    // Predicated region
    $region58: #{forward_pallas.1} parent=1 // pred_check
      _
    $region59: #{forward_pallas.1} parent=1 // pred_check_branch
      %106 = sbr.rel (0) target = $region61
    $region60: #{forward_pallas.1} parent=1 // pred_region
      _
    $region61: #{forward_pallas.1} parent=1 // pred_fallthru
      _
    // Predicated region
    $region62: #{forward_pallas.1} parent=1 // pred_check
      _
    $region63: #{forward_pallas.1} parent=1 // pred_check_branch
      %108 = sbr.rel (0) target = $region65
    $region64: #{forward_pallas.1} parent=1 // pred_region
      _
    $region65: #{forward_pallas.1} parent=1 // pred_fallthru
      _
    // Predicated region
    $region66: #{forward_pallas.1} parent=1 // pred_check
      _
    $region67: #{forward_pallas.1} parent=1 // pred_check_branch
      %110 = sbr.rel (0) target = $region69
    $region68: #{forward_pallas.1} parent=1 // pred_region
      _
    $region69: #{forward_pallas.1} parent=1 // pred_fallthru
      _
    // Predicated region
    $region70: #{forward_pallas.1} parent=1 // pred_check
      _
    $region71: #{forward_pallas.1} parent=1 // pred_check_branch
      %112 = sbr.rel (0) target = $region73
    $region72: #{forward_pallas.1} parent=1 // pred_region
      _
    $region73: #{forward_pallas.1} parent=1 // pred_fallthru
      _
    // Predicated region
    $region74: #{forward_pallas.1} parent=1 // pred_check
      _
    $region75: #{forward_pallas.1} parent=1 // pred_check_branch
      %114 = sbr.rel (0) target = $region77
    $region76: #{forward_pallas.1} parent=1 // pred_region
      _
    $region77: #{forward_pallas.1} parent=1 // pred_fallthru
      _
    // Predicated region
    $region78: #{forward_pallas.1} parent=1 // pred_check
      _
    $region79: #{forward_pallas.1} parent=1 // pred_check_branch
      %116 = sbr.rel (0) target = $region81
    $region80: #{forward_pallas.1} parent=1 // pred_region
      _
    $region81: #{forward_pallas.1} parent=1 // pred_fallthru
      _
    // Predicated region
    $region82: #{forward_pallas.1} parent=1 // pred_check
      _
    $region83: #{forward_pallas.1} parent=1 // pred_check_branch
      %118 = sbr.rel (0) target = $region85
    $region84: #{forward_pallas.1} parent=1 // pred_region
      _
    $region85: #{forward_pallas.1} parent=1 // pred_fallthru
      _
    // Predicated region
    $region86: #{forward_pallas.1} parent=1 // pred_check
      _
    $region87: #{forward_pallas.1} parent=1 // pred_check_branch
      %120 = sbr.rel (0) target = $region89
    $region88: #{forward_pallas.1} parent=1 // pred_region
      _
    $region89: #{forward_pallas.1} parent=1 // pred_fallthru
      _
    // Predicated region
    $region90: #{forward_pallas.1} parent=1 // pred_check
      _
    $region91: #{forward_pallas.1} parent=1 // pred_check_branch
      %122 = sbr.rel (0) target = $region93
    $region92: #{forward_pallas.1} parent=1 // pred_region
      _
    $region93: #{forward_pallas.1} parent=1 // pred_fallthru
      _
    // Predicated region
    $region94: #{forward_pallas.1} parent=1 // pred_check
      _
    $region95: #{forward_pallas.1} parent=1 // pred_check_branch
      %124 = sbr.rel (0) target = $region97
    $region96: #{forward_pallas.1} parent=1 // pred_region
      _
    $region97: #{forward_pallas.1} parent=1 // pred_fallthru
      _
    // Predicated region
    $region98: #{forward_pallas.1} parent=1 // pred_check
      _
    $region99: #{forward_pallas.1} parent=1 // pred_check_branch
      %126 = sbr.rel (0) target = $region101
    $region100: #{forward_pallas.1} parent=1 // pred_region
      _
    $region101: #{forward_pallas.1} parent=1 // pred_fallthru
      _
    // Predicated region
    $region102: #{forward_pallas.1} parent=1 // pred_check
      _
    $region103: #{forward_pallas.1} parent=1 // pred_check_branch
      %128 = sbr.rel (0) target = $region105
    $region104: #{forward_pallas.1} parent=1 // pred_region
      _
    $region105: #{forward_pallas.1} parent=1 // pred_fallthru
      _
    // Predicated region
    $region106: #{forward_pallas.1} parent=1 // pred_check
      _
    $region107: #{forward_pallas.1} parent=1 // pred_check_branch
      %130 = sbr.rel (0) target = $region109
    $region108: #{forward_pallas.1} parent=1 // pred_region
      _
    $region109: #{forward_pallas.1} parent=1 // pred_fallthru
      _
    // Predicated region
    $region110: #{forward_pallas.1} parent=1 // pred_check
      _
    $region111: #{forward_pallas.1} parent=1 // pred_check_branch
      %132 = sbr.rel (0) target = $region113
    $region112: #{forward_pallas.1} parent=1 // pred_region
      _
    $region113: #{forward_pallas.1} parent=1 // pred_fallthru
      _
    // Predicated region
    $region114: #{forward_pallas.1} parent=1 // pred_check
      _
    $region115: #{forward_pallas.1} parent=1 // pred_check_branch
      %134 = sbr.rel (0) target = $region117
    $region116: #{forward_pallas.1} parent=1 // pred_region
      _
    $region117: #{forward_pallas.1} parent=1 // pred_fallthru
      _
    // Predicated region
    $region118: #{forward_pallas.1} parent=1 // pred_check
      _
    $region119: #{forward_pallas.1} parent=1 // pred_check_branch
      %136 = sbr.rel (0) target = $region121
    $region120: #{forward_pallas.1} parent=1 // pred_region
      _
    $region121: #{forward_pallas.1} parent=1 // pred_fallthru
      _
    // Predicated region
    $region122: #{forward_pallas.1} parent=1 // pred_check
      _
    $region123: #{forward_pallas.1} parent=1 // pred_check_branch
      %138 = sbr.rel (0) target = $region125
    $region124: #{forward_pallas.1} parent=1 // pred_region
      _
    $region125: #{forward_pallas.1} parent=1 // pred_fallthru
      _
    // Predicated region
    $region126: #{forward_pallas.1} parent=1 // pred_check
      _
    $region127: #{forward_pallas.1} parent=1 // pred_check_branch
      %140 = sbr.rel (0) target = $region129
    $region128: #{forward_pallas.1} parent=1 // pred_region
      _
    $region129: #{forward_pallas.1} parent=1 // pred_fallthru
      _
    // Predicated region
    $region130: #{forward_pallas.1} parent=1 // pred_check
      _
    $region131: #{forward_pallas.1} parent=1 // pred_check_branch
      %142 = sbr.rel (0) target = $region133
    $region132: #{forward_pallas.1} parent=1 // pred_region
      _
    $region133: #{forward_pallas.1} parent=1 // pred_fallthru
      _
    // Predicated region
    $region134: #{forward_pallas.1} parent=1 // pred_check
      _
    $region135: #{forward_pallas.1} parent=1 // pred_check_branch
      %144 = sbr.rel (0) target = $region137
    $region136: #{forward_pallas.1} parent=1 // pred_region
      _
    $region137: #{forward_pallas.1} parent=1 // pred_fallthru
      _
    // Predicated region
    $region138: #{forward_pallas.1} parent=1 // pred_check
      _
    $region139: #{forward_pallas.1} parent=1 // pred_check_branch
      %146 = sbr.rel (0) target = $region141
    $region140: #{forward_pallas.1} parent=1 // pred_region
      _
    $region141: #{forward_pallas.1} parent=1 // pred_fallthru
      _
    %v147 = vld [vmem:[%s1] sm:$0xff]
    %v148 = vld [vmem:[%s1 + $0x8] sm:$0xff]
    %v149 = vld [vmem:[%s9] sm:$0x3]
    %v150 = vld [vmem:[%s15] sm:$0xff]
    %v151 = vld [vmem:[%s15 + $0x8] sm:$0xff]
    %v152 = vld [vmem:[%s15 + $0x10] sm:$0xff]
    %v153 = vld [vmem:[%s15 + $0x18] sm:$0xff]
    %v154 = vld [vmem:[%s17] sm:$0x1]
    %v155 = vld [vmem:[%s11] sm:$0xff]
    %v156 = vld [vmem:[%s11 + $0x8] sm:$0xff]
    %v157 = vld [vmem:[%s11 + $0x10] sm:$0xff]
    %v158 = vld [vmem:[%s11 + $0x18] sm:$0xff]
    %v159 = vld [vmem:[%s11 + $0x20] sm:$0xff]
    %v160 = vld [vmem:[%s11 + $0x28] sm:$0xff]
    %v161 = vld [vmem:[%s11 + $0x30] sm:$0xff]
    %v162 = vld [vmem:[%s11 + $0x38] sm:$0xff]
    %v163 = vld [vmem:[%s13] sm:$0x1]
    %v165 = vperm.slane %v163, 0
    %vm167 = vcmask 523264
    %v169 = vsel %vm167, %v149, 0
    %171 = vmatpush.msra.mxu0 0.0
    %172 = vmatpush.msra.mxu0 0.0
    %173 = vmatpush.msra.mxu0 0.0
    %174 = vmatpush.msra.mxu0 0.0
    %175 = vmatpush.msra.mxu0 0.0
    %176 = vmatpush.msra.mxu0 0.0
    %177 = vmatpush.msra.mxu0 0.0
    %178 = vmatpush.msra.mxu0 0.0
    %179 = vmatpush.msra.mxu0 %v162
    %180 = vmatpush.msra.mxu0 %v161
    %181 = vmatpush.msra.mxu0 %v160
    %182 = vmatpush.msra.mxu0 %v159
    %183 = vmatpush.msra.mxu0 %v158
    %184 = vmatpush.msra.mxu0 %v157
    %185 = vmatpush.msra.mxu0 %v156
    %186 = vmatpush.msra.mxu0 %v155
    %187 = vmatmul.f32.gmra.mxu0 %v169
    %v188 = vpop.f32.mrf.mxu0
    %v189 = vadd.f32 %v165, %v188
    %190 = vdwg.mxu0
    %v192 = vperm.slane %v154, 0
    %vm194 = vcmask 261120
    %v196 = vsel %vm194, %v189, 0
    %198 = vmatpush.msra.mxu0 0.0
    %199 = vmatpush.msra.mxu0 0.0
    %200 = vmatpush.msra.mxu0 0.0
    %201 = vmatpush.msra.mxu0 0.0
    %202 = vmatpush.msra.mxu0 0.0
    %203 = vmatpush.msra.mxu0 0.0
    %204 = vmatpush.msra.mxu0 0.0
    %205 = vmatpush.msra.mxu0 0.0
    %206 = vmatpush.msra.mxu0 0.0
    %207 = vmatpush.msra.mxu0 0.0
    %208 = vmatpush.msra.mxu0 0.0
    %209 = vmatpush.msra.mxu0 0.0
    %210 = vmatpush.msra.mxu0 %v153
    %211 = vmatpush.msra.mxu0 %v152
    %212 = vmatpush.msra.mxu0 %v151
    %213 = vmatpush.msra.mxu0 %v150
    %214 = vmatmul.f32.gmra.mxu0 %v196
    %v215 = vpop.f32.mrf.mxu0
    %v216 = vadd.f32 %v192, %v215
    %217 = vdwg.mxu0
    %v218 = vld [vmem:[%s5] sm:$0xff]
    %v219 = vld [vmem:[%s5 + $0x8] sm:$0xff]
    %vm220 = vcmp.gt.f32.partialorder %v218, 0.5
    %vm221 = vcmp.gt.f32.partialorder %v219, 0.5
    %v222 = vperm.slane %v216, 0
    %v223 = vsel %vm220, 1, 0
    %v224 = vsel %vm221, 1, 0
    %225 = vset.pattern.permute.xlu0 0
    %226 = vperm.xlu0 %225, %v223
    %v227 = vpop.permute.xlu0 %226
    %228 = vset.pattern.permute.xlu0 0
    %229 = vperm.xlu0 %228, %v224
    %v230 = vpop.permute.xlu0 %229
    %vm231 = vcmp.eq.s32.totalorder %v227, 1
    %vm232 = vcmp.eq.s32.totalorder %v230, 1
    %v233 = vsel %vm231, %v222, %v147
    %v234 = vsel %vm232, %v222, %v148
    %v235 = vperm.slane %v216, 1
    %236 = vset.pattern.permute.xlu0 1
    %237 = vperm.xlu0 %236, %v223
    %v238 = vpop.permute.xlu0 %237
    %239 = vset.pattern.permute.xlu0 1
    %240 = vperm.xlu0 %239, %v224
    %v241 = vpop.permute.xlu0 %240
    %vm242 = vcmp.eq.s32.totalorder %v238, 1
    %vm243 = vcmp.eq.s32.totalorder %v241, 1
    %v244 = vsel %vm242, %v235, %v233
    %v245 = vsel %vm243, %v235, %v234
    %254 = vrot.lane.b32.xlu0 %v155, 96
    %v255 = vpop.permute.xlu0 %254
    %256 = vrot.lane.b32.xlu0 %v156, 96
    %v257 = vpop.permute.xlu0 %256
    %258 = vrot.lane.b32.xlu0 %v157, 96
    %v259 = vpop.permute.xlu0 %258
    %260 = vrot.lane.b32.xlu0 %v158, 96
    %v261 = vpop.permute.xlu0 %260
    %262 = vrot.lane.b32.xlu0 %v159, 96
    %v263 = vpop.permute.xlu0 %262
    %264 = vrot.lane.b32.xlu0 %v160, 96
    %v265 = vpop.permute.xlu0 %264
    %266 = vrot.lane.b32.xlu0 %v161, 96
    %v267 = vpop.permute.xlu0 %266
    %268 = vrot.lane.b32.xlu0 %v162, 96
    %v269 = vpop.permute.xlu0 %268
    %278 = vrot.lane.b32.xlu0 %v165, 96
    %v279 = vpop.permute.xlu0 %278
    %281 = vmatpush.msra.mxu0 0.0
    %282 = vmatpush.msra.mxu0 0.0
    %283 = vmatpush.msra.mxu0 0.0
    %284 = vmatpush.msra.mxu0 0.0
    %285 = vmatpush.msra.mxu0 0.0
    %286 = vmatpush.msra.mxu0 0.0
    %287 = vmatpush.msra.mxu0 0.0
    %288 = vmatpush.msra.mxu0 0.0
    %289 = vmatpush.msra.mxu0 %v269
    %290 = vmatpush.msra.mxu0 %v267
    %291 = vmatpush.msra.mxu0 %v265
    %292 = vmatpush.msra.mxu0 %v263
    %293 = vmatpush.msra.mxu0 %v261
    %294 = vmatpush.msra.mxu0 %v259
    %295 = vmatpush.msra.mxu0 %v257
    %296 = vmatpush.msra.mxu0 %v255
    %297 = vmatmul.f32.gmra.mxu0 %v169
    %v298 = vpop.f32.mrf.mxu0
    %v299 = vadd.f32 %v279, %v298
    %300 = vdwg.mxu0
    %v302 = vsel %vm194, %v299, 0
    %304 = vmatpush.msra.mxu0 0.0
    %305 = vmatpush.msra.mxu0 0.0
    %306 = vmatpush.msra.mxu0 0.0
    %307 = vmatpush.msra.mxu0 0.0
    %308 = vmatpush.msra.mxu0 0.0
    %309 = vmatpush.msra.mxu0 0.0
    %310 = vmatpush.msra.mxu0 0.0
    %311 = vmatpush.msra.mxu0 0.0
    %312 = vmatpush.msra.mxu0 0.0
    %313 = vmatpush.msra.mxu0 0.0
    %314 = vmatpush.msra.mxu0 0.0
    %315 = vmatpush.msra.mxu0 0.0
    %316 = vmatpush.msra.mxu0 %v153
    %317 = vmatpush.msra.mxu0 %v152
    %318 = vmatpush.msra.mxu0 %v151
    %319 = vmatpush.msra.mxu0 %v150
    %320 = vmatmul.f32.gmra.mxu0 %v302
    %v321 = vpop.f32.mrf.mxu0
    %v322 = vadd.f32 %v192, %v321
    %323 = vdwg.mxu0
    %v324 = vperm.slane %v322, 0
    %325 = vset.pattern.permute.xlu0 2
    %326 = vperm.xlu0 %325, %v223
    %v327 = vpop.permute.xlu0 %326
    %328 = vset.pattern.permute.xlu0 2
    %329 = vperm.xlu0 %328, %v224
    %v330 = vpop.permute.xlu0 %329
    %vm331 = vcmp.eq.s32.totalorder %v327, 1
    %vm332 = vcmp.eq.s32.totalorder %v330, 1
    %v333 = vsel %vm331, %v324, %v244
    %v334 = vsel %vm332, %v324, %v245
    %v335 = vperm.slane %v322, 1
    %336 = vset.pattern.permute.xlu0 3
    %337 = vperm.xlu0 %336, %v223
    %v338 = vpop.permute.xlu0 %337
    %339 = vset.pattern.permute.xlu0 3
    %340 = vperm.xlu0 %339, %v224
    %v341 = vpop.permute.xlu0 %340
    %vm342 = vcmp.eq.s32.totalorder %v338, 1
    %vm343 = vcmp.eq.s32.totalorder %v341, 1
    %v344 = vsel %vm342, %v335, %v333
    %v345 = vsel %vm343, %v335, %v334
    %v346 = vmul.f32 %v344, 5.656854
    %v347 = vmul.f32 %v345, 5.656854
    %v348 = vld [vmem:[%s3] sm:$0xff]
    %v349 = vld [vmem:[%s3 + $0x8] sm:$0xff]
    %v350 = vadd.f32 %v346, %v348
    %v351 = vadd.f32 %v347, %v349
    %v352 = vld [vmem:[%s19] sm:$0x1]
    %v353 = vld [vmem:[%s21] sm:$0x1]
    %v354 = vsel %vm194, %v350, 0.0
    %355 = vadd.xlane.f32.xlu0 %v354
    %v356 = vpop.xlane.xlu0 %355
    %v357 = vsel %vm194, %v351, 0.0
    %358 = vadd.xlane.f32.xlu0 %v357
    %v359 = vpop.xlane.xlu0 %358
    %v360 = vrcp.pop 32.0
    %v361 = vmul.f32 32.0, %v360
    %v362 = vsub.f32 1.0, %v361
    %v363 = vmul.f32 %v360, %v362
    %v364 = vadd.f32 %v360, %v363
    %vm365 = vweird.f32 %v360
    %v366 = vsel %vm365, %v360, %v364
    %v367 = vmul.f32 %v356, %v366
    %v368 = vmul.f32 %v359, %v366
    %v369 = vsub.f32 %v350, %v367
    %v370 = vsub.f32 %v351, %v368
    %v371 = vmul.f32 %v369, %v369
    %v372 = vmul.f32 %v370, %v370
    %v373 = vsel %vm194, %v371, 0.0
    %374 = vadd.xlane.f32.xlu0 %v373
    %v375 = vpop.xlane.xlu0 %374
    %v376 = vsel %vm194, %v372, 0.0
    %377 = vadd.xlane.f32.xlu0 %v376
    %v378 = vpop.xlane.xlu0 %377
    %v379 = vmul.f32 %v375, %v366
    %v380 = vmul.f32 %v378, %v366
    %v381 = vadd.f32 %v379, 1e-05
    %v382 = vadd.f32 %v380, 1e-05
    %v383 = vrsqrt.pop %v381
    %v384 = vmul.f32 %v383, %v381
    %v385 = vmul.f32 %v384, %v383
    %v386 = vmul.f32 0.5, %v385
    %v387 = vsub.f32 1.5, %v386
    %v388 = vmul.f32 %v383, %v387
    %vm389 = vweird.f32 %v381
    %vm390 = vweird.f32 %v383
    %vm391 = vmor %vm389, %vm390
    %v392 = vsel %vm391, %v383, %v388
    %v393 = vrsqrt.pop %v382
    %v394 = vmul.f32 %v393, %v382
    %v395 = vmul.f32 %v394, %v393
    %v396 = vmul.f32 0.5, %v395
    %v397 = vsub.f32 1.5, %v396
    %v398 = vmul.f32 %v393, %v397
    %vm399 = vweird.f32 %v382
    %vm400 = vweird.f32 %v393
    %vm401 = vmor %vm399, %vm400
    %v402 = vsel %vm401, %v393, %v398
    %v403 = vmul.f32 %v369, %v392
    %v404 = vmul.f32 %v370, %v402
    %v406 = vperm.slane %v352, 0
    %v408 = vmul.f32 %v403, %v406
    %v409 = vmul.f32 %v404, %v406
    %v411 = vperm.slane %v353, 0
    %v413 = vadd.f32 %v408, %v411
    %v414 = vadd.f32 %v409, %v411
    %v415 = vld [vmem:[%s7] sm:$0xff]
    %v416 = vld [vmem:[%s7 + $0x8] sm:$0xff]
    %v417 = vld [vmem:[%s23] sm:$0xff]
    %v418 = vld [vmem:[%s23 + $0x8] sm:$0xff]
    %v419 = vld [vmem:[%s23 + $0x10] sm:$0xff]
    %v420 = vld [vmem:[%s23 + $0x18] sm:$0xff]
    %v421 = vld [vmem:[%s25] sm:$0x1]
    %v423 = vperm.slane %v421, 0
    %v426 = vsel %vm194, %v413, 0
    %v429 = vsel %vm194, %v414, 0
    %431 = vmatpush.msra.mxu0 0.0
    %432 = vmatpush.msra.mxu0 0.0
    %433 = vmatpush.msra.mxu0 0.0
    %434 = vmatpush.msra.mxu0 0.0
    %435 = vmatpush.msra.mxu0 0.0
    %436 = vmatpush.msra.mxu0 0.0
    %437 = vmatpush.msra.mxu0 0.0
    %438 = vmatpush.msra.mxu0 0.0
    %439 = vmatpush.msra.mxu0 0.0
    %440 = vmatpush.msra.mxu0 0.0
    %441 = vmatpush.msra.mxu0 0.0
    %442 = vmatpush.msra.mxu0 0.0
    %443 = vmatpush.msra.mxu0 %v420
    %444 = vmatpush.msra.mxu0 %v419
    %445 = vmatpush.msra.mxu0 %v418
    %446 = vmatpush.msra.mxu0 %v417
    %447 = vmatmul.f32.gmra.mxu0 %v426
    %v448 = vpop.f32.mrf.mxu0
    %v449 = vadd.f32 %v423, %v448
    %450 = vmatmul.f32.gmra.mxu0 %v429
    %v451 = vpop.f32.mrf.mxu0
    %v452 = vadd.f32 %v423, %v451
    %453 = vdwg.mxu0
    %v454 = vmul.f32 %v449, 0.35355338
    %v455 = vmul.f32 %v452, 0.35355338
    %v456 = vld [vmem:[%s27] sm:$0xff]
    %v457 = vld [vmem:[%s27 + $0x8] sm:$0xff]
    %v458 = vld [vmem:[%s27 + $0x10] sm:$0xff]
    %v459 = vld [vmem:[%s27 + $0x18] sm:$0xff]
    %462 = vrot.lane.b32.xlu0 %v449, 96
    %v463 = vpop.permute.xlu0 %462
    %464 = vrot.lane.b32.xlu0 %v452, 96
    %v465 = vpop.permute.xlu0 %464
    %vm466 = vcmask 64512
    %v468 = vsel %vm466, %v454, 0
    %v471 = vsel %vm466, %v455, 0
    %v473 = vsel %vm466, %v463, 0
    %v475 = vsel %vm466, %v465, 0
    %477 = vmatpush.xpose.msra.mxu0 0.0
    %478 = vmatpush.xpose.msra.mxu0 0.0
    %479 = vmatpush.xpose.msra.mxu0 0.0
    %480 = vmatpush.xpose.msra.mxu0 0.0
    %481 = vmatpush.xpose.msra.mxu0 0.0
    %482 = vmatpush.xpose.msra.mxu0 0.0
    %483 = vmatpush.xpose.msra.mxu0 0.0
    %484 = vmatpush.xpose.msra.mxu0 0.0
    %485 = vmatpush.xpose.msra.mxu0 0.0
    %486 = vmatpush.xpose.msra.mxu0 0.0
    %487 = vmatpush.xpose.msra.mxu0 0.0
    %488 = vmatpush.xpose.msra.mxu0 0.0
    %489 = vmatpush.xpose.msra.mxu0 0.0
    %490 = vmatpush.xpose.msra.mxu0 0.0
    %491 = vmatpush.xpose.msra.mxu0 %v475
    %492 = vmatpush.xpose.msra.mxu0 %v473
    %493 = vmatmul.f32.gmra.mxu0 %v468
    %v494 = vpop.f32.mrf.mxu0
    %v495 = vadd.f32 %v415, %v494
    %496 = vmatmul.f32.gmra.mxu0 %v471
    %v497 = vpop.f32.mrf.mxu0
    %v498 = vadd.f32 %v416, %v497
    %499 = vdwg.mxu0
    %vm500 = vcmask 130048
    %v501 = vsel %vm500, %v495, -inf
    %502 = vmax.xlane.f32.xlu0 %v501
    %v503 = vpop.xlane.xlu0 %502
    %v504 = vsel %vm500, %v498, -inf
    %505 = vmax.xlane.f32.xlu0 %v504
    %v506 = vpop.xlane.xlu0 %505
    %v507 = vsub.f32 %v495, %v503
    %v508 = vsub.f32 %v498, %v506
    %v509 = vmul.f32 %v507, 1.442695
    %v510 = vpow.pop %v509
    %v511 = vmul.f32 %v508, 1.442695
    %v512 = vpow.pop %v511
    %v513 = vsel %vm500, %v510, 0.0
    %514 = vadd.xlane.f32.xlu0 %v513
    %v515 = vpop.xlane.xlu0 %514
    %v516 = vsel %vm500, %v512, 0.0
    %517 = vadd.xlane.f32.xlu0 %v516
    %v518 = vpop.xlane.xlu0 %517
    %v519 = vrcp.pop %v515
    %v520 = vmul.f32 %v515, %v519
    %v521 = vsub.f32 1.0, %v520
    %v522 = vmul.f32 %v519, %v521
    %v523 = vadd.f32 %v519, %v522
    %vm524 = vweird.f32 %v515
    %vm525 = vweird.f32 %v519
    %vm526 = vmor %vm524, %vm525
    %v527 = vsel %vm526, %v519, %v523
    %v528 = vand.u32 2147483647, %v515
    %vm529 = vcmp.eq.f32.partialorder %v528, 8.507059e+37
    %v530 = vand.u32 %v515, 2147483648
    %v531 = vor.u32 1.1754944e-38, %v530
    %v532 = vsel %vm529, %v531, %v527
    %v533 = vrcp.pop %v518
    %v534 = vmul.f32 %v518, %v533
    %v535 = vsub.f32 1.0, %v534
    %v536 = vmul.f32 %v533, %v535
    %v537 = vadd.f32 %v533, %v536
    %vm538 = vweird.f32 %v518
    %vm539 = vweird.f32 %v533
    %vm540 = vmor %vm538, %vm539
    %v541 = vsel %vm540, %v533, %v537
    %v542 = vand.u32 2147483647, %v518
    %vm543 = vcmp.eq.f32.partialorder %v542, 8.507059e+37
    %v544 = vand.u32 %v518, 2147483648
    %v545 = vor.u32 1.1754944e-38, %v544
    %v546 = vsel %vm543, %v545, %v541
    %547 = vrot.lane.b32.xlu0 %v449, 64
    %v548 = vpop.permute.xlu0 %547
    %549 = vrot.lane.b32.xlu0 %v452, 64
    %v550 = vpop.permute.xlu0 %549
    %v554 = vsel %vm500, %v510, 0
    %v557 = vsel %vm500, %v512, 0
    %559 = vmatpush.msra.mxu0 0.0
    %560 = vmatpush.msra.mxu0 0.0
    %561 = vmatpush.msra.mxu0 0.0
    %562 = vmatpush.msra.mxu0 0.0
    %563 = vmatpush.msra.mxu0 0.0
    %564 = vmatpush.msra.mxu0 0.0
    %565 = vmatpush.msra.mxu0 0.0
    %566 = vmatpush.msra.mxu0 0.0
    %567 = vmatpush.msra.mxu0 0.0
    %568 = vmatpush.msra.mxu0 0.0
    %569 = vmatpush.msra.mxu0 0.0
    %570 = vmatpush.msra.mxu0 0.0
    %571 = vmatpush.msra.mxu0 0.0
    %572 = vmatpush.msra.mxu0 0.0
    %573 = vmatpush.msra.mxu0 %v550
    %574 = vmatpush.msra.mxu0 %v548
    %575 = vmatmul.f32.gmra.mxu0 %v554
    %v576 = vpop.f32.mrf.mxu0
    %v577 = vadd.f32 0.0, %v576
    %578 = vmatmul.f32.gmra.mxu0 %v557
    %v579 = vpop.f32.mrf.mxu0
    %v580 = vadd.f32 0.0, %v579
    %581 = vdwg.mxu0
    %v582 = vmul.f32 %v577, %v532
    %v583 = vmul.f32 %v580, %v546
    %584 = vrot.lane.b32.xlu0 %v454, 120
    %v585 = vpop.permute.xlu0 %584
    %586 = vrot.lane.b32.xlu0 %v455, 120
    %v587 = vpop.permute.xlu0 %586
    %588 = vrot.lane.b32.xlu0 %v449, 88
    %v589 = vpop.permute.xlu0 %588
    %590 = vrot.lane.b32.xlu0 %v452, 88
    %v591 = vpop.permute.xlu0 %590
    %v592 = vsel %vm466, %v585, 0
    %v594 = vsel %vm466, %v587, 0
    %v596 = vsel %vm466, %v589, 0
    %v598 = vsel %vm466, %v591, 0
    %600 = vmatpush.xpose.msra.mxu0 0.0
    %601 = vmatpush.xpose.msra.mxu0 0.0
    %602 = vmatpush.xpose.msra.mxu0 0.0
    %603 = vmatpush.xpose.msra.mxu0 0.0
    %604 = vmatpush.xpose.msra.mxu0 0.0
    %605 = vmatpush.xpose.msra.mxu0 0.0
    %606 = vmatpush.xpose.msra.mxu0 0.0
    %607 = vmatpush.xpose.msra.mxu0 0.0
    %608 = vmatpush.xpose.msra.mxu0 0.0
    %609 = vmatpush.xpose.msra.mxu0 0.0
    %610 = vmatpush.xpose.msra.mxu0 0.0
    %611 = vmatpush.xpose.msra.mxu0 0.0
    %612 = vmatpush.xpose.msra.mxu0 0.0
    %613 = vmatpush.xpose.msra.mxu0 0.0
    %614 = vmatpush.xpose.msra.mxu0 %v598
    %615 = vmatpush.xpose.msra.mxu0 %v596
    %616 = vmatmul.f32.gmra.mxu0 %v592
    %v617 = vpop.f32.mrf.mxu0
    %v618 = vadd.f32 %v415, %v617
    %619 = vmatmul.f32.gmra.mxu0 %v594
    %v620 = vpop.f32.mrf.mxu0
    %v621 = vadd.f32 %v416, %v620
    %622 = vdwg.mxu0
    %v623 = vsel %vm500, %v618, -inf
    %624 = vmax.xlane.f32.xlu0 %v623
    %v625 = vpop.xlane.xlu0 %624
    %v626 = vsel %vm500, %v621, -inf
    %627 = vmax.xlane.f32.xlu0 %v626
    %v628 = vpop.xlane.xlu0 %627
    %v629 = vsub.f32 %v618, %v625
    %v630 = vsub.f32 %v621, %v628
    %v631 = vmul.f32 %v629, 1.442695
    %v632 = vpow.pop %v631
    %v633 = vmul.f32 %v630, 1.442695
    %v634 = vpow.pop %v633
    %v635 = vsel %vm500, %v632, 0.0
    %636 = vadd.xlane.f32.xlu0 %v635
    %v637 = vpop.xlane.xlu0 %636
    %v638 = vsel %vm500, %v634, 0.0
    %639 = vadd.xlane.f32.xlu0 %v638
    %v640 = vpop.xlane.xlu0 %639
    %v641 = vrcp.pop %v637
    %v642 = vmul.f32 %v637, %v641
    %v643 = vsub.f32 1.0, %v642
    %v644 = vmul.f32 %v641, %v643
    %v645 = vadd.f32 %v641, %v644
    %vm646 = vweird.f32 %v637
    %vm647 = vweird.f32 %v641
    %vm648 = vmor %vm646, %vm647
    %v649 = vsel %vm648, %v641, %v645
    %v650 = vand.u32 2147483647, %v637
    %vm651 = vcmp.eq.f32.partialorder %v650, 8.507059e+37
    %v652 = vand.u32 %v637, 2147483648
    %v653 = vor.u32 1.1754944e-38, %v652
    %v654 = vsel %vm651, %v653, %v649
    %v655 = vrcp.pop %v640
    %v656 = vmul.f32 %v640, %v655
    %v657 = vsub.f32 1.0, %v656
    %v658 = vmul.f32 %v655, %v657
    %v659 = vadd.f32 %v655, %v658
    %vm660 = vweird.f32 %v640
    %vm661 = vweird.f32 %v655
    %vm662 = vmor %vm660, %vm661
    %v663 = vsel %vm662, %v655, %v659
    %v664 = vand.u32 2147483647, %v640
    %vm665 = vcmp.eq.f32.partialorder %v664, 8.507059e+37
    %v666 = vand.u32 %v640, 2147483648
    %v667 = vor.u32 1.1754944e-38, %v666
    %v668 = vsel %vm665, %v667, %v663
    %669 = vrot.lane.b32.xlu0 %v449, 56
    %v670 = vpop.permute.xlu0 %669
    %671 = vrot.lane.b32.xlu0 %v452, 56
    %v672 = vpop.permute.xlu0 %671
    %v676 = vsel %vm500, %v632, 0
    %v679 = vsel %vm500, %v634, 0
    %681 = vmatpush.msra.mxu0 0.0
    %682 = vmatpush.msra.mxu0 0.0
    %683 = vmatpush.msra.mxu0 0.0
    %684 = vmatpush.msra.mxu0 0.0
    %685 = vmatpush.msra.mxu0 0.0
    %686 = vmatpush.msra.mxu0 0.0
    %687 = vmatpush.msra.mxu0 0.0
    %688 = vmatpush.msra.mxu0 0.0
    %689 = vmatpush.msra.mxu0 0.0
    %690 = vmatpush.msra.mxu0 0.0
    %691 = vmatpush.msra.mxu0 0.0
    %692 = vmatpush.msra.mxu0 0.0
    %693 = vmatpush.msra.mxu0 0.0
    %694 = vmatpush.msra.mxu0 0.0
    %695 = vmatpush.msra.mxu0 %v672
    %696 = vmatpush.msra.mxu0 %v670
    %697 = vmatmul.f32.gmra.mxu0 %v676
    %v698 = vpop.f32.mrf.mxu0
    %v699 = vadd.f32 0.0, %v698
    %700 = vmatmul.f32.gmra.mxu0 %v679
    %v701 = vpop.f32.mrf.mxu0
    %v702 = vadd.f32 0.0, %v701
    %703 = vdwg.mxu0
    %v704 = vmul.f32 %v699, %v654
    %v705 = vmul.f32 %v702, %v668
    %v707 = vsel %vm466, %v704, 0
    %v710 = vsel %vm466, %v705, 0
    %712 = vmatpush.msra.mxu0 0.0
    %713 = vmatpush.msra.mxu0 0.0
    %714 = vmatpush.msra.mxu0 0.0
    %715 = vmatpush.msra.mxu0 0.0
    %716 = vmatpush.msra.mxu0 0.0
    %717 = vmatpush.msra.mxu0 0.0
    %718 = vmatpush.msra.mxu0 0.0
    %719 = vmatpush.msra.mxu0 0.0
    %720 = vmatpush.msra.mxu0 0.0
    %721 = vmatpush.msra.mxu0 0.0
    %722 = vmatpush.msra.mxu0 0.0
    %723 = vmatpush.msra.mxu0 0.0
    %724 = vmatpush.msra.mxu0 0.0
    %725 = vmatpush.msra.mxu0 0.0
    %726 = vmatpush.msra.mxu0 0.0
    %727 = vmatpush.msra.mxu0 %v457
    %728 = vmatmul.f32.gmra.mxu0 %v707
    %v729 = vpop.f32.mrf.mxu0
    %v730 = vadd.f32 0.0, %v729
    %731 = vmatmul.f32.gmra.mxu0 %v710
    %v732 = vpop.f32.mrf.mxu0
    %v733 = vadd.f32 0.0, %v732
    %734 = vdwg.mxu0
    %v736 = vsel %vm466, %v582, 0
    %v739 = vsel %vm466, %v583, 0
    %741 = vmatpush.msra.mxu0 0.0
    %742 = vmatpush.msra.mxu0 0.0
    %743 = vmatpush.msra.mxu0 0.0
    %744 = vmatpush.msra.mxu0 0.0
    %745 = vmatpush.msra.mxu0 0.0
    %746 = vmatpush.msra.mxu0 0.0
    %747 = vmatpush.msra.mxu0 0.0
    %748 = vmatpush.msra.mxu0 0.0
    %749 = vmatpush.msra.mxu0 0.0
    %750 = vmatpush.msra.mxu0 0.0
    %751 = vmatpush.msra.mxu0 0.0
    %752 = vmatpush.msra.mxu0 0.0
    %753 = vmatpush.msra.mxu0 0.0
    %754 = vmatpush.msra.mxu0 0.0
    %755 = vmatpush.msra.mxu0 0.0
    %756 = vmatpush.msra.mxu0 %v456
    %757 = vmatmul.f32.gmra.mxu0 %v736
    %v758 = vpop.f32.mrf.mxu0
    %v759 = vadd.f32 %v730, %v758
    %760 = vmatmul.f32.gmra.mxu0 %v739
    %v761 = vpop.f32.mrf.mxu0
    %v762 = vadd.f32 %v733, %v761
    %763 = vdwg.mxu0
    %764 = vrot.lane.b32.xlu0 %v454, 112
    %v765 = vpop.permute.xlu0 %764
    %766 = vrot.lane.b32.xlu0 %v455, 112
    %v767 = vpop.permute.xlu0 %766
    %768 = vrot.lane.b32.xlu0 %v449, 80
    %v769 = vpop.permute.xlu0 %768
    %770 = vrot.lane.b32.xlu0 %v452, 80
    %v771 = vpop.permute.xlu0 %770
    %v772 = vsel %vm466, %v765, 0
    %v774 = vsel %vm466, %v767, 0
    %v776 = vsel %vm466, %v769, 0
    %v778 = vsel %vm466, %v771, 0
    %780 = vmatpush.xpose.msra.mxu0 0.0
    %781 = vmatpush.xpose.msra.mxu0 0.0
    %782 = vmatpush.xpose.msra.mxu0 0.0
    %783 = vmatpush.xpose.msra.mxu0 0.0
    %784 = vmatpush.xpose.msra.mxu0 0.0
    %785 = vmatpush.xpose.msra.mxu0 0.0
    %786 = vmatpush.xpose.msra.mxu0 0.0
    %787 = vmatpush.xpose.msra.mxu0 0.0
    %788 = vmatpush.xpose.msra.mxu0 0.0
    %789 = vmatpush.xpose.msra.mxu0 0.0
    %790 = vmatpush.xpose.msra.mxu0 0.0
    %791 = vmatpush.xpose.msra.mxu0 0.0
    %792 = vmatpush.xpose.msra.mxu0 0.0
    %793 = vmatpush.xpose.msra.mxu0 0.0
    %794 = vmatpush.xpose.msra.mxu0 %v778
    %795 = vmatpush.xpose.msra.mxu0 %v776
    %796 = vmatmul.f32.gmra.mxu0 %v772
    %v797 = vpop.f32.mrf.mxu0
    %v798 = vadd.f32 %v415, %v797
    %799 = vmatmul.f32.gmra.mxu0 %v774
    %v800 = vpop.f32.mrf.mxu0
    %v801 = vadd.f32 %v416, %v800
    %802 = vdwg.mxu0
    %v803 = vsel %vm500, %v798, -inf
    %804 = vmax.xlane.f32.xlu0 %v803
    %v805 = vpop.xlane.xlu0 %804
    %v806 = vsel %vm500, %v801, -inf
    %807 = vmax.xlane.f32.xlu0 %v806
    %v808 = vpop.xlane.xlu0 %807
    %v809 = vsub.f32 %v798, %v805
    %v810 = vsub.f32 %v801, %v808
    %v811 = vmul.f32 %v809, 1.442695
    %v812 = vpow.pop %v811
    %v813 = vmul.f32 %v810, 1.442695
    %v814 = vpow.pop %v813
    %v815 = vsel %vm500, %v812, 0.0
    %816 = vadd.xlane.f32.xlu0 %v815
    %v817 = vpop.xlane.xlu0 %816
    %v818 = vsel %vm500, %v814, 0.0
    %819 = vadd.xlane.f32.xlu0 %v818
    %v820 = vpop.xlane.xlu0 %819
    %v821 = vrcp.pop %v817
    %v822 = vmul.f32 %v817, %v821
    %v823 = vsub.f32 1.0, %v822
    %v824 = vmul.f32 %v821, %v823
    %v825 = vadd.f32 %v821, %v824
    %vm826 = vweird.f32 %v817
    %vm827 = vweird.f32 %v821
    %vm828 = vmor %vm826, %vm827
    %v829 = vsel %vm828, %v821, %v825
    %v830 = vand.u32 2147483647, %v817
    %vm831 = vcmp.eq.f32.partialorder %v830, 8.507059e+37
    %v832 = vand.u32 %v817, 2147483648
    %v833 = vor.u32 1.1754944e-38, %v832
    %v834 = vsel %vm831, %v833, %v829
    %v835 = vrcp.pop %v820
    %v836 = vmul.f32 %v820, %v835
    %v837 = vsub.f32 1.0, %v836
    %v838 = vmul.f32 %v835, %v837
    %v839 = vadd.f32 %v835, %v838
    %vm840 = vweird.f32 %v820
    %vm841 = vweird.f32 %v835
    %vm842 = vmor %vm840, %vm841
    %v843 = vsel %vm842, %v835, %v839
    %v844 = vand.u32 2147483647, %v820
    %vm845 = vcmp.eq.f32.partialorder %v844, 8.507059e+37
    %v846 = vand.u32 %v820, 2147483648
    %v847 = vor.u32 1.1754944e-38, %v846
    %v848 = vsel %vm845, %v847, %v843
    %849 = vrot.lane.b32.xlu0 %v449, 48
    %v850 = vpop.permute.xlu0 %849
    %851 = vrot.lane.b32.xlu0 %v452, 48
    %v852 = vpop.permute.xlu0 %851
    %v856 = vsel %vm500, %v812, 0
    %v859 = vsel %vm500, %v814, 0
    %861 = vmatpush.msra.mxu0 0.0
    %862 = vmatpush.msra.mxu0 0.0
    %863 = vmatpush.msra.mxu0 0.0
    %864 = vmatpush.msra.mxu0 0.0
    %865 = vmatpush.msra.mxu0 0.0
    %866 = vmatpush.msra.mxu0 0.0
    %867 = vmatpush.msra.mxu0 0.0
    %868 = vmatpush.msra.mxu0 0.0
    %869 = vmatpush.msra.mxu0 0.0
    %870 = vmatpush.msra.mxu0 0.0
    %871 = vmatpush.msra.mxu0 0.0
    %872 = vmatpush.msra.mxu0 0.0
    %873 = vmatpush.msra.mxu0 0.0
    %874 = vmatpush.msra.mxu0 0.0
    %875 = vmatpush.msra.mxu0 %v852
    %876 = vmatpush.msra.mxu0 %v850
    %877 = vmatmul.f32.gmra.mxu0 %v856
    %v878 = vpop.f32.mrf.mxu0
    %v879 = vadd.f32 0.0, %v878
    %880 = vmatmul.f32.gmra.mxu0 %v859
    %v881 = vpop.f32.mrf.mxu0
    %v882 = vadd.f32 0.0, %v881
    %883 = vdwg.mxu0
    %v884 = vmul.f32 %v879, %v834
    %v885 = vmul.f32 %v882, %v848
    %v887 = vsel %vm466, %v884, 0
    %v890 = vsel %vm466, %v885, 0
    %892 = vmatpush.msra.mxu0 0.0
    %893 = vmatpush.msra.mxu0 0.0
    %894 = vmatpush.msra.mxu0 0.0
    %895 = vmatpush.msra.mxu0 0.0
    %896 = vmatpush.msra.mxu0 0.0
    %897 = vmatpush.msra.mxu0 0.0
    %898 = vmatpush.msra.mxu0 0.0
    %899 = vmatpush.msra.mxu0 0.0
    %900 = vmatpush.msra.mxu0 0.0
    %901 = vmatpush.msra.mxu0 0.0
    %902 = vmatpush.msra.mxu0 0.0
    %903 = vmatpush.msra.mxu0 0.0
    %904 = vmatpush.msra.mxu0 0.0
    %905 = vmatpush.msra.mxu0 0.0
    %906 = vmatpush.msra.mxu0 0.0
    %907 = vmatpush.msra.mxu0 %v458
    %908 = vmatmul.f32.gmra.mxu0 %v887
    %v909 = vpop.f32.mrf.mxu0
    %v910 = vadd.f32 0.0, %v909
    %911 = vmatmul.f32.gmra.mxu0 %v890
    %v912 = vpop.f32.mrf.mxu0
    %v913 = vadd.f32 0.0, %v912
    %914 = vdwg.mxu0
    %v915 = vadd.f32 %v759, %v910
    %v916 = vadd.f32 %v762, %v913
    %917 = vrot.lane.b32.xlu0 %v454, 104
    %v918 = vpop.permute.xlu0 %917
    %919 = vrot.lane.b32.xlu0 %v455, 104
    %v920 = vpop.permute.xlu0 %919
    %921 = vrot.lane.b32.xlu0 %v449, 72
    %v922 = vpop.permute.xlu0 %921
    %923 = vrot.lane.b32.xlu0 %v452, 72
    %v924 = vpop.permute.xlu0 %923
    %v925 = vsel %vm466, %v918, 0
    %v927 = vsel %vm466, %v920, 0
    %v929 = vsel %vm466, %v922, 0
    %v931 = vsel %vm466, %v924, 0
    %933 = vmatpush.xpose.msra.mxu0 0.0
    %934 = vmatpush.xpose.msra.mxu0 0.0
    %935 = vmatpush.xpose.msra.mxu0 0.0
    %936 = vmatpush.xpose.msra.mxu0 0.0
    %937 = vmatpush.xpose.msra.mxu0 0.0
    %938 = vmatpush.xpose.msra.mxu0 0.0
    %939 = vmatpush.xpose.msra.mxu0 0.0
    %940 = vmatpush.xpose.msra.mxu0 0.0
    %941 = vmatpush.xpose.msra.mxu0 0.0
    %942 = vmatpush.xpose.msra.mxu0 0.0
    %943 = vmatpush.xpose.msra.mxu0 0.0
    %944 = vmatpush.xpose.msra.mxu0 0.0
    %945 = vmatpush.xpose.msra.mxu0 0.0
    %946 = vmatpush.xpose.msra.mxu0 0.0
    %947 = vmatpush.xpose.msra.mxu0 %v931
    %948 = vmatpush.xpose.msra.mxu0 %v929
    %949 = vmatmul.f32.gmra.mxu0 %v925
    %v950 = vpop.f32.mrf.mxu0
    %v951 = vadd.f32 %v415, %v950
    %952 = vmatmul.f32.gmra.mxu0 %v927
    %v953 = vpop.f32.mrf.mxu0
    %v954 = vadd.f32 %v416, %v953
    %955 = vdwg.mxu0
    %v956 = vsel %vm500, %v951, -inf
    %957 = vmax.xlane.f32.xlu0 %v956
    %v958 = vpop.xlane.xlu0 %957
    %v959 = vsel %vm500, %v954, -inf
    %960 = vmax.xlane.f32.xlu0 %v959
    %v961 = vpop.xlane.xlu0 %960
    %v962 = vsub.f32 %v951, %v958
    %v963 = vsub.f32 %v954, %v961
    %v964 = vmul.f32 %v962, 1.442695
    %v965 = vpow.pop %v964
    %v966 = vmul.f32 %v963, 1.442695
    %v967 = vpow.pop %v966
    %v968 = vsel %vm500, %v965, 0.0
    %969 = vadd.xlane.f32.xlu0 %v968
    %v970 = vpop.xlane.xlu0 %969
    %v971 = vsel %vm500, %v967, 0.0
    %972 = vadd.xlane.f32.xlu0 %v971
    %v973 = vpop.xlane.xlu0 %972
    %v974 = vrcp.pop %v970
    %v975 = vmul.f32 %v970, %v974
    %v976 = vsub.f32 1.0, %v975
    %v977 = vmul.f32 %v974, %v976
    %v978 = vadd.f32 %v974, %v977
    %vm979 = vweird.f32 %v970
    %vm980 = vweird.f32 %v974
    %vm981 = vmor %vm979, %vm980
    %v982 = vsel %vm981, %v974, %v978
    %v983 = vand.u32 2147483647, %v970
    %vm984 = vcmp.eq.f32.partialorder %v983, 8.507059e+37
    %v985 = vand.u32 %v970, 2147483648
    %v986 = vor.u32 1.1754944e-38, %v985
    %v987 = vsel %vm984, %v986, %v982
    %v988 = vrcp.pop %v973
    %v989 = vmul.f32 %v973, %v988
    %v990 = vsub.f32 1.0, %v989
    %v991 = vmul.f32 %v988, %v990
    %v992 = vadd.f32 %v988, %v991
    %vm993 = vweird.f32 %v973
    %vm994 = vweird.f32 %v988
    %vm995 = vmor %vm993, %vm994
    %v996 = vsel %vm995, %v988, %v992
    %v997 = vand.u32 2147483647, %v973
    %vm998 = vcmp.eq.f32.partialorder %v997, 8.507059e+37
    %v999 = vand.u32 %v973, 2147483648
    %v1000 = vor.u32 1.1754944e-38, %v999
    %v1001 = vsel %vm998, %v1000, %v996
    %1002 = vrot.lane.b32.xlu0 %v449, 40
    %v1003 = vpop.permute.xlu0 %1002
    %1004 = vrot.lane.b32.xlu0 %v452, 40
    %v1005 = vpop.permute.xlu0 %1004
    %v1009 = vsel %vm500, %v965, 0
    %v1012 = vsel %vm500, %v967, 0
    %1014 = vmatpush.msra.mxu0 0.0
    %1015 = vmatpush.msra.mxu0 0.0
    %1016 = vmatpush.msra.mxu0 0.0
    %1017 = vmatpush.msra.mxu0 0.0
    %1018 = vmatpush.msra.mxu0 0.0
    %1019 = vmatpush.msra.mxu0 0.0
    %1020 = vmatpush.msra.mxu0 0.0
    %1021 = vmatpush.msra.mxu0 0.0
    %1022 = vmatpush.msra.mxu0 0.0
    %1023 = vmatpush.msra.mxu0 0.0
    %1024 = vmatpush.msra.mxu0 0.0
    %1025 = vmatpush.msra.mxu0 0.0
    %1026 = vmatpush.msra.mxu0 0.0
    %1027 = vmatpush.msra.mxu0 0.0
    %1028 = vmatpush.msra.mxu0 %v1005
    %1029 = vmatpush.msra.mxu0 %v1003
    %1030 = vmatmul.f32.gmra.mxu0 %v1009
    %v1031 = vpop.f32.mrf.mxu0
    %v1032 = vadd.f32 0.0, %v1031
    %1033 = vmatmul.f32.gmra.mxu0 %v1012
    %v1034 = vpop.f32.mrf.mxu0
    %v1035 = vadd.f32 0.0, %v1034
    %1036 = vdwg.mxu0
    %v1037 = vmul.f32 %v1032, %v987
    %v1038 = vmul.f32 %v1035, %v1001
    %v1040 = vsel %vm466, %v1037, 0
    %v1043 = vsel %vm466, %v1038, 0
    %1045 = vmatpush.msra.mxu0 0.0
    %1046 = vmatpush.msra.mxu0 0.0
    %1047 = vmatpush.msra.mxu0 0.0
    %1048 = vmatpush.msra.mxu0 0.0
    %1049 = vmatpush.msra.mxu0 0.0
    %1050 = vmatpush.msra.mxu0 0.0
    %1051 = vmatpush.msra.mxu0 0.0
    %1052 = vmatpush.msra.mxu0 0.0
    %1053 = vmatpush.msra.mxu0 0.0
    %1054 = vmatpush.msra.mxu0 0.0
    %1055 = vmatpush.msra.mxu0 0.0
    %1056 = vmatpush.msra.mxu0 0.0
    %1057 = vmatpush.msra.mxu0 0.0
    %1058 = vmatpush.msra.mxu0 0.0
    %1059 = vmatpush.msra.mxu0 0.0
    %1060 = vmatpush.msra.mxu0 %v459
    %1061 = vmatmul.f32.gmra.mxu0 %v1040
    %v1062 = vpop.f32.mrf.mxu0
    %v1063 = vadd.f32 0.0, %v1062
    %1064 = vmatmul.f32.gmra.mxu0 %v1043
    %v1065 = vpop.f32.mrf.mxu0
    %v1066 = vadd.f32 0.0, %v1065
    %1067 = vdwg.mxu0
    %v1068 = vadd.f32 %v915, %v1063
    %v1069 = vadd.f32 %v916, %v1066
    %v1070 = vld [vmem:[%s29] sm:$0x1]
    %v1072 = vperm.slane %v1070, 0
    %v1074 = vadd.f32 %v1068, %v1072
    %v1075 = vadd.f32 %v1069, %v1072
    %v1076 = vadd.f32 %v413, %v1074
    %v1077 = vadd.f32 %v414, %v1075
    %v1078 = vld [vmem:[%s31] sm:$0x1]
    %v1079 = vld [vmem:[%s33] sm:$0x1]
    %v1080 = vsel %vm194, %v1076, 0.0
    %1081 = vadd.xlane.f32.xlu0 %v1080
    %v1082 = vpop.xlane.xlu0 %1081
    %v1083 = vsel %vm194, %v1077, 0.0
    %1084 = vadd.xlane.f32.xlu0 %v1083
    %v1085 = vpop.xlane.xlu0 %1084
    %v1086 = vmul.f32 %v1082, %v366
    %v1087 = vmul.f32 %v1085, %v366
    %v1088 = vsub.f32 %v1076, %v1086
    %v1089 = vsub.f32 %v1077, %v1087
    %v1090 = vmul.f32 %v1088, %v1088
    %v1091 = vmul.f32 %v1089, %v1089
    %v1092 = vsel %vm194, %v1090, 0.0
    %1093 = vadd.xlane.f32.xlu0 %v1092
    %v1094 = vpop.xlane.xlu0 %1093
    %v1095 = vsel %vm194, %v1091, 0.0
    %1096 = vadd.xlane.f32.xlu0 %v1095
    %v1097 = vpop.xlane.xlu0 %1096
    %v1098 = vmul.f32 %v1094, %v366
    %v1099 = vmul.f32 %v1097, %v366
    %v1100 = vadd.f32 %v1098, 1e-05
    %v1101 = vadd.f32 %v1099, 1e-05
    %v1102 = vrsqrt.pop %v1100
    %v1103 = vmul.f32 %v1102, %v1100
    %v1104 = vmul.f32 %v1103, %v1102
    %v1105 = vmul.f32 0.5, %v1104
    %v1106 = vsub.f32 1.5, %v1105
    %v1107 = vmul.f32 %v1102, %v1106
    %vm1108 = vweird.f32 %v1100
    %vm1109 = vweird.f32 %v1102
    %vm1110 = vmor %vm1108, %vm1109
    %v1111 = vsel %vm1110, %v1102, %v1107
    %v1112 = vrsqrt.pop %v1101
    %v1113 = vmul.f32 %v1112, %v1101
    %v1114 = vmul.f32 %v1113, %v1112
    %v1115 = vmul.f32 0.5, %v1114
    %v1116 = vsub.f32 1.5, %v1115
    %v1117 = vmul.f32 %v1112, %v1116
    %vm1118 = vweird.f32 %v1101
    %vm1119 = vweird.f32 %v1112
    %vm1120 = vmor %vm1118, %vm1119
    %v1121 = vsel %vm1120, %v1112, %v1117
    %v1122 = vmul.f32 %v1088, %v1111
    %v1123 = vmul.f32 %v1089, %v1121
    %v1125 = vperm.slane %v1078, 0
    %v1127 = vmul.f32 %v1122, %v1125
    %v1128 = vmul.f32 %v1123, %v1125
    %v1130 = vperm.slane %v1079, 0
    %v1132 = vadd.f32 %v1127, %v1130
    %v1133 = vadd.f32 %v1128, %v1130
    %v1134 = vld [vmem:[%s35] sm:$0xff]
    %v1135 = vld [vmem:[%s35 + $0x8] sm:$0xff]
    %v1136 = vld [vmem:[%s35 + $0x10] sm:$0xff]
    %v1137 = vld [vmem:[%s35 + $0x18] sm:$0xff]
    %v1138 = vld [vmem:[%s37] sm:$0x1]
    %v1140 = vperm.slane %v1138, 0
    %v1143 = vsel %vm194, %v1132, 0
    %v1146 = vsel %vm194, %v1133, 0
    %1148 = vmatpush.msra.mxu0 0.0
    %1149 = vmatpush.msra.mxu0 0.0
    %1150 = vmatpush.msra.mxu0 0.0
    %1151 = vmatpush.msra.mxu0 0.0
    %1152 = vmatpush.msra.mxu0 0.0
    %1153 = vmatpush.msra.mxu0 0.0
    %1154 = vmatpush.msra.mxu0 0.0
    %1155 = vmatpush.msra.mxu0 0.0
    %1156 = vmatpush.msra.mxu0 0.0
    %1157 = vmatpush.msra.mxu0 0.0
    %1158 = vmatpush.msra.mxu0 0.0
    %1159 = vmatpush.msra.mxu0 0.0
    %1160 = vmatpush.msra.mxu0 %v1137
    %1161 = vmatpush.msra.mxu0 %v1136
    %1162 = vmatpush.msra.mxu0 %v1135
    %1163 = vmatpush.msra.mxu0 %v1134
    %1164 = vmatmul.f32.gmra.mxu0 %v1143
    %v1165 = vpop.f32.mrf.mxu0
    %v1166 = vadd.f32 %v1140, %v1165
    %1167 = vmatmul.f32.gmra.mxu0 %v1146
    %v1168 = vpop.f32.mrf.mxu0
    %v1169 = vadd.f32 %v1140, %v1168
    %1170 = vdwg.mxu0
    %v1171 = vmul.f32 %v1166, 0.5
    %v1172 = vmul.f32 %v1169, 0.5
    %v1173 = vmul.f32 %v1166, %v1166
    %v1174 = vmul.f32 %v1169, %v1169
    %v1175 = vmul.f32 %v1166, %v1173
    %v1176 = vmul.f32 %v1169, %v1174
    %v1177 = vmul.f32 %v1175, 0.044715
    %v1178 = vmul.f32 %v1176, 0.044715
    %v1179 = vadd.f32 %v1166, %v1177
    %v1180 = vadd.f32 %v1169, %v1178
    %v1181 = vmul.f32 %v1179, 0.7978846
    %v1182 = vmul.f32 %v1180, 0.7978846
    %v1183 = vtanh.pop %v1181
    %v1184 = vtanh.pop %v1182
    %v1185 = vadd.f32 %v1183, 1.0
    %v1186 = vadd.f32 %v1184, 1.0
    %v1187 = vmul.f32 %v1171, %v1185
    %v1188 = vmul.f32 %v1172, %v1186
    %v1189 = vld [vmem:[%s39] sm:$0xff]
    %v1190 = vld [vmem:[%s39 + $0x8] sm:$0xff]
    %v1191 = vld [vmem:[%s39 + $0x10] sm:$0xff]
    %v1192 = vld [vmem:[%s39 + $0x18] sm:$0xff]
    %v1193 = vld [vmem:[%s39 + $0x20] sm:$0xff]
    %v1194 = vld [vmem:[%s39 + $0x28] sm:$0xff]
    %v1195 = vld [vmem:[%s39 + $0x30] sm:$0xff]
    %v1196 = vld [vmem:[%s39 + $0x38] sm:$0xff]
    %v1197 = vld [vmem:[%s41] sm:$0x1]
    %v1199 = vperm.slane %v1197, 0
    %v1202 = vsel %vm167, %v1187, 0
    %v1205 = vsel %vm167, %v1188, 0
    %1207 = vmatpush.msra.mxu0 0.0
    %1208 = vmatpush.msra.mxu0 0.0
    %1209 = vmatpush.msra.mxu0 0.0
    %1210 = vmatpush.msra.mxu0 0.0
    %1211 = vmatpush.msra.mxu0 0.0
    %1212 = vmatpush.msra.mxu0 0.0
    %1213 = vmatpush.msra.mxu0 0.0
    %1214 = vmatpush.msra.mxu0 0.0
    %1215 = vmatpush.msra.mxu0 %v1196
    %1216 = vmatpush.msra.mxu0 %v1195
    %1217 = vmatpush.msra.mxu0 %v1194
    %1218 = vmatpush.msra.mxu0 %v1193
    %1219 = vmatpush.msra.mxu0 %v1192
    %1220 = vmatpush.msra.mxu0 %v1191
    %1221 = vmatpush.msra.mxu0 %v1190
    %1222 = vmatpush.msra.mxu0 %v1189
    %1223 = vmatmul.f32.gmra.mxu0 %v1202
    %v1224 = vpop.f32.mrf.mxu0
    %v1225 = vadd.f32 %v1199, %v1224
    %1226 = vmatmul.f32.gmra.mxu0 %v1205
    %v1227 = vpop.f32.mrf.mxu0
    %v1228 = vadd.f32 %v1199, %v1227
    %1229 = vdwg.mxu0
    %v1230 = vadd.f32 %v1132, %v1225
    %v1231 = vadd.f32 %v1133, %v1228
    %v1232 = vld [vmem:[%s43] sm:$0x1]
    %v1233 = vld [vmem:[%s45] sm:$0x1]
    %v1234 = vsel %vm194, %v1230, 0.0
    %1235 = vadd.xlane.f32.xlu0 %v1234
    %v1236 = vpop.xlane.xlu0 %1235
    %v1237 = vsel %vm194, %v1231, 0.0
    %1238 = vadd.xlane.f32.xlu0 %v1237
    %v1239 = vpop.xlane.xlu0 %1238
    %v1240 = vmul.f32 %v1236, %v366
    %v1241 = vmul.f32 %v1239, %v366
    %v1242 = vsub.f32 %v1230, %v1240
    %v1243 = vsub.f32 %v1231, %v1241
    %v1244 = vmul.f32 %v1242, %v1242
    %v1245 = vmul.f32 %v1243, %v1243
    %v1246 = vsel %vm194, %v1244, 0.0
    %1247 = vadd.xlane.f32.xlu0 %v1246
    %v1248 = vpop.xlane.xlu0 %1247
    %v1249 = vsel %vm194, %v1245, 0.0
    %1250 = vadd.xlane.f32.xlu0 %v1249
    %v1251 = vpop.xlane.xlu0 %1250
    %v1252 = vmul.f32 %v1248, %v366
    %v1253 = vmul.f32 %v1251, %v366
    %v1254 = vadd.f32 %v1252, 1e-05
    %v1255 = vadd.f32 %v1253, 1e-05
    %v1256 = vrsqrt.pop %v1254
    %v1257 = vmul.f32 %v1256, %v1254
    %v1258 = vmul.f32 %v1257, %v1256
    %v1259 = vmul.f32 0.5, %v1258
    %v1260 = vsub.f32 1.5, %v1259
    %v1261 = vmul.f32 %v1256, %v1260
    %vm1262 = vweird.f32 %v1254
    %vm1263 = vweird.f32 %v1256
    %vm1264 = vmor %vm1262, %vm1263
    %v1265 = vsel %vm1264, %v1256, %v1261
    %v1266 = vrsqrt.pop %v1255
    %v1267 = vmul.f32 %v1266, %v1255
    %v1268 = vmul.f32 %v1267, %v1266
    %v1269 = vmul.f32 0.5, %v1268
    %v1270 = vsub.f32 1.5, %v1269
    %v1271 = vmul.f32 %v1266, %v1270
    %vm1272 = vweird.f32 %v1255
    %vm1273 = vweird.f32 %v1266
    %vm1274 = vmor %vm1272, %vm1273
    %v1275 = vsel %vm1274, %v1266, %v1271
    %v1276 = vmul.f32 %v1242, %v1265
    %v1277 = vmul.f32 %v1243, %v1275
    %v1279 = vperm.slane %v1232, 0
    %v1281 = vmul.f32 %v1276, %v1279
    %v1282 = vmul.f32 %v1277, %v1279
    %v1284 = vperm.slane %v1233, 0
    %v1286 = vadd.f32 %v1281, %v1284
    %v1287 = vadd.f32 %v1282, %v1284
    %v1288 = vld [vmem:[%s47] sm:$0xff]
    %v1289 = vld [vmem:[%s47 + $0x8] sm:$0xff]
    %v1290 = vld [vmem:[%s47 + $0x10] sm:$0xff]
    %v1291 = vld [vmem:[%s47 + $0x18] sm:$0xff]
    %v1292 = vld [vmem:[%s49] sm:$0x1]
    %v1294 = vperm.slane %v1292, 0
    %v1297 = vsel %vm194, %v1286, 0
    %v1300 = vsel %vm194, %v1287, 0
    %1302 = vmatpush.msra.mxu0 0.0
    %1303 = vmatpush.msra.mxu0 0.0
    %1304 = vmatpush.msra.mxu0 0.0
    %1305 = vmatpush.msra.mxu0 0.0
    %1306 = vmatpush.msra.mxu0 0.0
    %1307 = vmatpush.msra.mxu0 0.0
    %1308 = vmatpush.msra.mxu0 0.0
    %1309 = vmatpush.msra.mxu0 0.0
    %1310 = vmatpush.msra.mxu0 0.0
    %1311 = vmatpush.msra.mxu0 0.0
    %1312 = vmatpush.msra.mxu0 0.0
    %1313 = vmatpush.msra.mxu0 0.0
    %1314 = vmatpush.msra.mxu0 %v1291
    %1315 = vmatpush.msra.mxu0 %v1290
    %1316 = vmatpush.msra.mxu0 %v1289
    %1317 = vmatpush.msra.mxu0 %v1288
    %1318 = vmatmul.f32.gmra.mxu0 %v1297
    %v1319 = vpop.f32.mrf.mxu0
    %v1320 = vadd.f32 %v1294, %v1319
    %1321 = vmatmul.f32.gmra.mxu0 %v1300
    %v1322 = vpop.f32.mrf.mxu0
    %v1323 = vadd.f32 %v1294, %v1322
    %1324 = vdwg.mxu0
    %v1325 = vmul.f32 %v1320, 0.35355338
    %v1326 = vmul.f32 %v1323, 0.35355338
    %v1327 = vld [vmem:[%s51] sm:$0xff]
    %v1328 = vld [vmem:[%s51 + $0x8] sm:$0xff]
    %v1329 = vld [vmem:[%s51 + $0x10] sm:$0xff]
    %v1330 = vld [vmem:[%s51 + $0x18] sm:$0xff]
    %1333 = vrot.lane.b32.xlu0 %v1320, 96
    %v1334 = vpop.permute.xlu0 %1333
    %1335 = vrot.lane.b32.xlu0 %v1323, 96
    %v1336 = vpop.permute.xlu0 %1335
    %v1338 = vsel %vm466, %v1325, 0
    %v1341 = vsel %vm466, %v1326, 0
    %v1343 = vsel %vm466, %v1334, 0
    %v1345 = vsel %vm466, %v1336, 0
    %1347 = vmatpush.xpose.msra.mxu0 0.0
    %1348 = vmatpush.xpose.msra.mxu0 0.0
    %1349 = vmatpush.xpose.msra.mxu0 0.0
    %1350 = vmatpush.xpose.msra.mxu0 0.0
    %1351 = vmatpush.xpose.msra.mxu0 0.0
    %1352 = vmatpush.xpose.msra.mxu0 0.0
    %1353 = vmatpush.xpose.msra.mxu0 0.0
    %1354 = vmatpush.xpose.msra.mxu0 0.0
    %1355 = vmatpush.xpose.msra.mxu0 0.0
    %1356 = vmatpush.xpose.msra.mxu0 0.0
    %1357 = vmatpush.xpose.msra.mxu0 0.0
    %1358 = vmatpush.xpose.msra.mxu0 0.0
    %1359 = vmatpush.xpose.msra.mxu0 0.0
    %1360 = vmatpush.xpose.msra.mxu0 0.0
    %1361 = vmatpush.xpose.msra.mxu0 %v1345
    %1362 = vmatpush.xpose.msra.mxu0 %v1343
    %1363 = vmatmul.f32.gmra.mxu0 %v1338
    %v1364 = vpop.f32.mrf.mxu0
    %v1365 = vadd.f32 %v415, %v1364
    %1366 = vmatmul.f32.gmra.mxu0 %v1341
    %v1367 = vpop.f32.mrf.mxu0
    %v1368 = vadd.f32 %v416, %v1367
    %1369 = vdwg.mxu0
    %v1370 = vsel %vm500, %v1365, -inf
    %1371 = vmax.xlane.f32.xlu0 %v1370
    %v1372 = vpop.xlane.xlu0 %1371
    %v1373 = vsel %vm500, %v1368, -inf
    %1374 = vmax.xlane.f32.xlu0 %v1373
    %v1375 = vpop.xlane.xlu0 %1374
    %v1376 = vsub.f32 %v1365, %v1372
    %v1377 = vsub.f32 %v1368, %v1375
    %v1378 = vmul.f32 %v1376, 1.442695
    %v1379 = vpow.pop %v1378
    %v1380 = vmul.f32 %v1377, 1.442695
    %v1381 = vpow.pop %v1380
    %v1382 = vsel %vm500, %v1379, 0.0
    %1383 = vadd.xlane.f32.xlu0 %v1382
    %v1384 = vpop.xlane.xlu0 %1383
    %v1385 = vsel %vm500, %v1381, 0.0
    %1386 = vadd.xlane.f32.xlu0 %v1385
    %v1387 = vpop.xlane.xlu0 %1386
    %v1388 = vrcp.pop %v1384
    %v1389 = vmul.f32 %v1384, %v1388
    %v1390 = vsub.f32 1.0, %v1389
    %v1391 = vmul.f32 %v1388, %v1390
    %v1392 = vadd.f32 %v1388, %v1391
    %vm1393 = vweird.f32 %v1384
    %vm1394 = vweird.f32 %v1388
    %vm1395 = vmor %vm1393, %vm1394
    %v1396 = vsel %vm1395, %v1388, %v1392
    %v1397 = vand.u32 2147483647, %v1384
    %vm1398 = vcmp.eq.f32.partialorder %v1397, 8.507059e+37
    %v1399 = vand.u32 %v1384, 2147483648
    %v1400 = vor.u32 1.1754944e-38, %v1399
    %v1401 = vsel %vm1398, %v1400, %v1396
    %v1402 = vrcp.pop %v1387
    %v1403 = vmul.f32 %v1387, %v1402
    %v1404 = vsub.f32 1.0, %v1403
    %v1405 = vmul.f32 %v1402, %v1404
    %v1406 = vadd.f32 %v1402, %v1405
    %vm1407 = vweird.f32 %v1387
    %vm1408 = vweird.f32 %v1402
    %vm1409 = vmor %vm1407, %vm1408
    %v1410 = vsel %vm1409, %v1402, %v1406
    %v1411 = vand.u32 2147483647, %v1387
    %vm1412 = vcmp.eq.f32.partialorder %v1411, 8.507059e+37
    %v1413 = vand.u32 %v1387, 2147483648
    %v1414 = vor.u32 1.1754944e-38, %v1413
    %v1415 = vsel %vm1412, %v1414, %v1410
    %1416 = vrot.lane.b32.xlu0 %v1320, 64
    %v1417 = vpop.permute.xlu0 %1416
    %1418 = vrot.lane.b32.xlu0 %v1323, 64
    %v1419 = vpop.permute.xlu0 %1418
    %v1423 = vsel %vm500, %v1379, 0
    %v1426 = vsel %vm500, %v1381, 0
    %1428 = vmatpush.msra.mxu0 0.0
    %1429 = vmatpush.msra.mxu0 0.0
    %1430 = vmatpush.msra.mxu0 0.0
    %1431 = vmatpush.msra.mxu0 0.0
    %1432 = vmatpush.msra.mxu0 0.0
    %1433 = vmatpush.msra.mxu0 0.0
    %1434 = vmatpush.msra.mxu0 0.0
    %1435 = vmatpush.msra.mxu0 0.0
    %1436 = vmatpush.msra.mxu0 0.0
    %1437 = vmatpush.msra.mxu0 0.0
    %1438 = vmatpush.msra.mxu0 0.0
    %1439 = vmatpush.msra.mxu0 0.0
    %1440 = vmatpush.msra.mxu0 0.0
    %1441 = vmatpush.msra.mxu0 0.0
    %1442 = vmatpush.msra.mxu0 %v1419
    %1443 = vmatpush.msra.mxu0 %v1417
    %1444 = vmatmul.f32.gmra.mxu0 %v1423
    %v1445 = vpop.f32.mrf.mxu0
    %v1446 = vadd.f32 0.0, %v1445
    %1447 = vmatmul.f32.gmra.mxu0 %v1426
    %v1448 = vpop.f32.mrf.mxu0
    %v1449 = vadd.f32 0.0, %v1448
    %1450 = vdwg.mxu0
    %v1451 = vmul.f32 %v1446, %v1401
    %v1452 = vmul.f32 %v1449, %v1415
    %1453 = vrot.lane.b32.xlu0 %v1325, 120
    %v1454 = vpop.permute.xlu0 %1453
    %1455 = vrot.lane.b32.xlu0 %v1326, 120
    %v1456 = vpop.permute.xlu0 %1455
    %1457 = vrot.lane.b32.xlu0 %v1320, 88
    %v1458 = vpop.permute.xlu0 %1457
    %1459 = vrot.lane.b32.xlu0 %v1323, 88
    %v1460 = vpop.permute.xlu0 %1459
    %v1461 = vsel %vm466, %v1454, 0
    %v1463 = vsel %vm466, %v1456, 0
    %v1465 = vsel %vm466, %v1458, 0
    %v1467 = vsel %vm466, %v1460, 0
    %1469 = vmatpush.xpose.msra.mxu0 0.0
    %1470 = vmatpush.xpose.msra.mxu0 0.0
    %1471 = vmatpush.xpose.msra.mxu0 0.0
    %1472 = vmatpush.xpose.msra.mxu0 0.0
    %1473 = vmatpush.xpose.msra.mxu0 0.0
    %1474 = vmatpush.xpose.msra.mxu0 0.0
    %1475 = vmatpush.xpose.msra.mxu0 0.0
    %1476 = vmatpush.xpose.msra.mxu0 0.0
    %1477 = vmatpush.xpose.msra.mxu0 0.0
    %1478 = vmatpush.xpose.msra.mxu0 0.0
    %1479 = vmatpush.xpose.msra.mxu0 0.0
    %1480 = vmatpush.xpose.msra.mxu0 0.0
    %1481 = vmatpush.xpose.msra.mxu0 0.0
    %1482 = vmatpush.xpose.msra.mxu0 0.0
    %1483 = vmatpush.xpose.msra.mxu0 %v1467
    %1484 = vmatpush.xpose.msra.mxu0 %v1465
    %1485 = vmatmul.f32.gmra.mxu0 %v1461
    %v1486 = vpop.f32.mrf.mxu0
    %v1487 = vadd.f32 %v415, %v1486
    %1488 = vmatmul.f32.gmra.mxu0 %v1463
    %v1489 = vpop.f32.mrf.mxu0
    %v1490 = vadd.f32 %v416, %v1489
    %1491 = vdwg.mxu0
    %v1492 = vsel %vm500, %v1487, -inf
    %1493 = vmax.xlane.f32.xlu0 %v1492
    %v1494 = vpop.xlane.xlu0 %1493
    %v1495 = vsel %vm500, %v1490, -inf
    %1496 = vmax.xlane.f32.xlu0 %v1495
    %v1497 = vpop.xlane.xlu0 %1496
    %v1498 = vsub.f32 %v1487, %v1494
    %v1499 = vsub.f32 %v1490, %v1497
    %v1500 = vmul.f32 %v1498, 1.442695
    %v1501 = vpow.pop %v1500
    %v1502 = vmul.f32 %v1499, 1.442695
    %v1503 = vpow.pop %v1502
    %v1504 = vsel %vm500, %v1501, 0.0
    %1505 = vadd.xlane.f32.xlu0 %v1504
    %v1506 = vpop.xlane.xlu0 %1505
    %v1507 = vsel %vm500, %v1503, 0.0
    %1508 = vadd.xlane.f32.xlu0 %v1507
    %v1509 = vpop.xlane.xlu0 %1508
    %v1510 = vrcp.pop %v1506
    %v1511 = vmul.f32 %v1506, %v1510
    %v1512 = vsub.f32 1.0, %v1511
    %v1513 = vmul.f32 %v1510, %v1512
    %v1514 = vadd.f32 %v1510, %v1513
    %vm1515 = vweird.f32 %v1506
    %vm1516 = vweird.f32 %v1510
    %vm1517 = vmor %vm1515, %vm1516
    %v1518 = vsel %vm1517, %v1510, %v1514
    %v1519 = vand.u32 2147483647, %v1506
    %vm1520 = vcmp.eq.f32.partialorder %v1519, 8.507059e+37
    %v1521 = vand.u32 %v1506, 2147483648
    %v1522 = vor.u32 1.1754944e-38, %v1521
    %v1523 = vsel %vm1520, %v1522, %v1518
    %v1524 = vrcp.pop %v1509
    %v1525 = vmul.f32 %v1509, %v1524
    %v1526 = vsub.f32 1.0, %v1525
    %v1527 = vmul.f32 %v1524, %v1526
    %v1528 = vadd.f32 %v1524, %v1527
    %vm1529 = vweird.f32 %v1509
    %vm1530 = vweird.f32 %v1524
    %vm1531 = vmor %vm1529, %vm1530
    %v1532 = vsel %vm1531, %v1524, %v1528
    %v1533 = vand.u32 2147483647, %v1509
    %vm1534 = vcmp.eq.f32.partialorder %v1533, 8.507059e+37
    %v1535 = vand.u32 %v1509, 2147483648
    %v1536 = vor.u32 1.1754944e-38, %v1535
    %v1537 = vsel %vm1534, %v1536, %v1532
    %1538 = vrot.lane.b32.xlu0 %v1320, 56
    %v1539 = vpop.permute.xlu0 %1538
    %1540 = vrot.lane.b32.xlu0 %v1323, 56
    %v1541 = vpop.permute.xlu0 %1540
    %v1545 = vsel %vm500, %v1501, 0
    %v1548 = vsel %vm500, %v1503, 0
    %1550 = vmatpush.msra.mxu0 0.0
    %1551 = vmatpush.msra.mxu0 0.0
    %1552 = vmatpush.msra.mxu0 0.0
    %1553 = vmatpush.msra.mxu0 0.0
    %1554 = vmatpush.msra.mxu0 0.0
    %1555 = vmatpush.msra.mxu0 0.0
    %1556 = vmatpush.msra.mxu0 0.0
    %1557 = vmatpush.msra.mxu0 0.0
    %1558 = vmatpush.msra.mxu0 0.0
    %1559 = vmatpush.msra.mxu0 0.0
    %1560 = vmatpush.msra.mxu0 0.0
    %1561 = vmatpush.msra.mxu0 0.0
    %1562 = vmatpush.msra.mxu0 0.0
    %1563 = vmatpush.msra.mxu0 0.0
    %1564 = vmatpush.msra.mxu0 %v1541
    %1565 = vmatpush.msra.mxu0 %v1539
    %1566 = vmatmul.f32.gmra.mxu0 %v1545
    %v1567 = vpop.f32.mrf.mxu0
    %v1568 = vadd.f32 0.0, %v1567
    %1569 = vmatmul.f32.gmra.mxu0 %v1548
    %v1570 = vpop.f32.mrf.mxu0
    %v1571 = vadd.f32 0.0, %v1570
    %1572 = vdwg.mxu0
    %v1573 = vmul.f32 %v1568, %v1523
    %v1574 = vmul.f32 %v1571, %v1537
    %v1576 = vsel %vm466, %v1573, 0
    %v1579 = vsel %vm466, %v1574, 0
    %1581 = vmatpush.msra.mxu0 0.0
    %1582 = vmatpush.msra.mxu0 0.0
    %1583 = vmatpush.msra.mxu0 0.0
    %1584 = vmatpush.msra.mxu0 0.0
    %1585 = vmatpush.msra.mxu0 0.0
    %1586 = vmatpush.msra.mxu0 0.0
    %1587 = vmatpush.msra.mxu0 0.0
    %1588 = vmatpush.msra.mxu0 0.0
    %1589 = vmatpush.msra.mxu0 0.0
    %1590 = vmatpush.msra.mxu0 0.0
    %1591 = vmatpush.msra.mxu0 0.0
    %1592 = vmatpush.msra.mxu0 0.0
    %1593 = vmatpush.msra.mxu0 0.0
    %1594 = vmatpush.msra.mxu0 0.0
    %1595 = vmatpush.msra.mxu0 0.0
    %1596 = vmatpush.msra.mxu0 %v1328
    %1597 = vmatmul.f32.gmra.mxu0 %v1576
    %v1598 = vpop.f32.mrf.mxu0
    %v1599 = vadd.f32 0.0, %v1598
    %1600 = vmatmul.f32.gmra.mxu0 %v1579
    %v1601 = vpop.f32.mrf.mxu0
    %v1602 = vadd.f32 0.0, %v1601
    %1603 = vdwg.mxu0
    %v1605 = vsel %vm466, %v1451, 0
    %v1608 = vsel %vm466, %v1452, 0
    %1610 = vmatpush.msra.mxu0 0.0
    %1611 = vmatpush.msra.mxu0 0.0
    %1612 = vmatpush.msra.mxu0 0.0
    %1613 = vmatpush.msra.mxu0 0.0
    %1614 = vmatpush.msra.mxu0 0.0
    %1615 = vmatpush.msra.mxu0 0.0
    %1616 = vmatpush.msra.mxu0 0.0
    %1617 = vmatpush.msra.mxu0 0.0
    %1618 = vmatpush.msra.mxu0 0.0
    %1619 = vmatpush.msra.mxu0 0.0
    %1620 = vmatpush.msra.mxu0 0.0
    %1621 = vmatpush.msra.mxu0 0.0
    %1622 = vmatpush.msra.mxu0 0.0
    %1623 = vmatpush.msra.mxu0 0.0
    %1624 = vmatpush.msra.mxu0 0.0
    %1625 = vmatpush.msra.mxu0 %v1327
    %1626 = vmatmul.f32.gmra.mxu0 %v1605
    %v1627 = vpop.f32.mrf.mxu0
    %v1628 = vadd.f32 %v1599, %v1627
    %1629 = vmatmul.f32.gmra.mxu0 %v1608
    %v1630 = vpop.f32.mrf.mxu0
    %v1631 = vadd.f32 %v1602, %v1630
    %1632 = vdwg.mxu0
    %1633 = vrot.lane.b32.xlu0 %v1325, 112
    %v1634 = vpop.permute.xlu0 %1633
    %1635 = vrot.lane.b32.xlu0 %v1326, 112
    %v1636 = vpop.permute.xlu0 %1635
    %1637 = vrot.lane.b32.xlu0 %v1320, 80
    %v1638 = vpop.permute.xlu0 %1637
    %1639 = vrot.lane.b32.xlu0 %v1323, 80
    %v1640 = vpop.permute.xlu0 %1639
    %v1641 = vsel %vm466, %v1634, 0
    %v1643 = vsel %vm466, %v1636, 0
    %v1645 = vsel %vm466, %v1638, 0
    %v1647 = vsel %vm466, %v1640, 0
    %1649 = vmatpush.xpose.msra.mxu0 0.0
    %1650 = vmatpush.xpose.msra.mxu0 0.0
    %1651 = vmatpush.xpose.msra.mxu0 0.0
    %1652 = vmatpush.xpose.msra.mxu0 0.0
    %1653 = vmatpush.xpose.msra.mxu0 0.0
    %1654 = vmatpush.xpose.msra.mxu0 0.0
    %1655 = vmatpush.xpose.msra.mxu0 0.0
    %1656 = vmatpush.xpose.msra.mxu0 0.0
    %1657 = vmatpush.xpose.msra.mxu0 0.0
    %1658 = vmatpush.xpose.msra.mxu0 0.0
    %1659 = vmatpush.xpose.msra.mxu0 0.0
    %1660 = vmatpush.xpose.msra.mxu0 0.0
    %1661 = vmatpush.xpose.msra.mxu0 0.0
    %1662 = vmatpush.xpose.msra.mxu0 0.0
    %1663 = vmatpush.xpose.msra.mxu0 %v1647
    %1664 = vmatpush.xpose.msra.mxu0 %v1645
    %1665 = vmatmul.f32.gmra.mxu0 %v1641
    %v1666 = vpop.f32.mrf.mxu0
    %v1667 = vadd.f32 %v415, %v1666
    %1668 = vmatmul.f32.gmra.mxu0 %v1643
    %v1669 = vpop.f32.mrf.mxu0
    %v1670 = vadd.f32 %v416, %v1669
    %1671 = vdwg.mxu0
    %v1672 = vsel %vm500, %v1667, -inf
    %1673 = vmax.xlane.f32.xlu0 %v1672
    %v1674 = vpop.xlane.xlu0 %1673
    %v1675 = vsel %vm500, %v1670, -inf
    %1676 = vmax.xlane.f32.xlu0 %v1675
    %v1677 = vpop.xlane.xlu0 %1676
    %v1678 = vsub.f32 %v1667, %v1674
    %v1679 = vsub.f32 %v1670, %v1677
    %v1680 = vmul.f32 %v1678, 1.442695
    %v1681 = vpow.pop %v1680
    %v1682 = vmul.f32 %v1679, 1.442695
    %v1683 = vpow.pop %v1682
    %v1684 = vsel %vm500, %v1681, 0.0
    %1685 = vadd.xlane.f32.xlu0 %v1684
    %v1686 = vpop.xlane.xlu0 %1685
    %v1687 = vsel %vm500, %v1683, 0.0
    %1688 = vadd.xlane.f32.xlu0 %v1687
    %v1689 = vpop.xlane.xlu0 %1688
    %v1690 = vrcp.pop %v1686
    %v1691 = vmul.f32 %v1686, %v1690
    %v1692 = vsub.f32 1.0, %v1691
    %v1693 = vmul.f32 %v1690, %v1692
    %v1694 = vadd.f32 %v1690, %v1693
    %vm1695 = vweird.f32 %v1686
    %vm1696 = vweird.f32 %v1690
    %vm1697 = vmor %vm1695, %vm1696
    %v1698 = vsel %vm1697, %v1690, %v1694
    %v1699 = vand.u32 2147483647, %v1686
    %vm1700 = vcmp.eq.f32.partialorder %v1699, 8.507059e+37
    %v1701 = vand.u32 %v1686, 2147483648
    %v1702 = vor.u32 1.1754944e-38, %v1701
    %v1703 = vsel %vm1700, %v1702, %v1698
    %v1704 = vrcp.pop %v1689
    %v1705 = vmul.f32 %v1689, %v1704
    %v1706 = vsub.f32 1.0, %v1705
    %v1707 = vmul.f32 %v1704, %v1706
    %v1708 = vadd.f32 %v1704, %v1707
    %vm1709 = vweird.f32 %v1689
    %vm1710 = vweird.f32 %v1704
    %vm1711 = vmor %vm1709, %vm1710
    %v1712 = vsel %vm1711, %v1704, %v1708
    %v1713 = vand.u32 2147483647, %v1689
    %vm1714 = vcmp.eq.f32.partialorder %v1713, 8.507059e+37
    %v1715 = vand.u32 %v1689, 2147483648
    %v1716 = vor.u32 1.1754944e-38, %v1715
    %v1717 = vsel %vm1714, %v1716, %v1712
    %1718 = vrot.lane.b32.xlu0 %v1320, 48
    %v1719 = vpop.permute.xlu0 %1718
    %1720 = vrot.lane.b32.xlu0 %v1323, 48
    %v1721 = vpop.permute.xlu0 %1720
    %v1725 = vsel %vm500, %v1681, 0
    %v1728 = vsel %vm500, %v1683, 0
    %1730 = vmatpush.msra.mxu0 0.0
    %1731 = vmatpush.msra.mxu0 0.0
    %1732 = vmatpush.msra.mxu0 0.0
    %1733 = vmatpush.msra.mxu0 0.0
    %1734 = vmatpush.msra.mxu0 0.0
    %1735 = vmatpush.msra.mxu0 0.0
    %1736 = vmatpush.msra.mxu0 0.0
    %1737 = vmatpush.msra.mxu0 0.0
    %1738 = vmatpush.msra.mxu0 0.0
    %1739 = vmatpush.msra.mxu0 0.0
    %1740 = vmatpush.msra.mxu0 0.0
    %1741 = vmatpush.msra.mxu0 0.0
    %1742 = vmatpush.msra.mxu0 0.0
    %1743 = vmatpush.msra.mxu0 0.0
    %1744 = vmatpush.msra.mxu0 %v1721
    %1745 = vmatpush.msra.mxu0 %v1719
    %1746 = vmatmul.f32.gmra.mxu0 %v1725
    %v1747 = vpop.f32.mrf.mxu0
    %v1748 = vadd.f32 0.0, %v1747
    %1749 = vmatmul.f32.gmra.mxu0 %v1728
    %v1750 = vpop.f32.mrf.mxu0
    %v1751 = vadd.f32 0.0, %v1750
    %1752 = vdwg.mxu0
    %v1753 = vmul.f32 %v1748, %v1703
    %v1754 = vmul.f32 %v1751, %v1717
    %v1756 = vsel %vm466, %v1753, 0
    %v1759 = vsel %vm466, %v1754, 0
    %1761 = vmatpush.msra.mxu0 0.0
    %1762 = vmatpush.msra.mxu0 0.0
    %1763 = vmatpush.msra.mxu0 0.0
    %1764 = vmatpush.msra.mxu0 0.0
    %1765 = vmatpush.msra.mxu0 0.0
    %1766 = vmatpush.msra.mxu0 0.0
    %1767 = vmatpush.msra.mxu0 0.0
    %1768 = vmatpush.msra.mxu0 0.0
    %1769 = vmatpush.msra.mxu0 0.0
    %1770 = vmatpush.msra.mxu0 0.0
    %1771 = vmatpush.msra.mxu0 0.0
    %1772 = vmatpush.msra.mxu0 0.0
    %1773 = vmatpush.msra.mxu0 0.0
    %1774 = vmatpush.msra.mxu0 0.0
    %1775 = vmatpush.msra.mxu0 0.0
    %1776 = vmatpush.msra.mxu0 %v1329
    %1777 = vmatmul.f32.gmra.mxu0 %v1756
    %v1778 = vpop.f32.mrf.mxu0
    %v1779 = vadd.f32 0.0, %v1778
    %1780 = vmatmul.f32.gmra.mxu0 %v1759
    %v1781 = vpop.f32.mrf.mxu0
    %v1782 = vadd.f32 0.0, %v1781
    %1783 = vdwg.mxu0
    %v1784 = vadd.f32 %v1628, %v1779
    %v1785 = vadd.f32 %v1631, %v1782
    %1786 = vrot.lane.b32.xlu0 %v1325, 104
    %v1787 = vpop.permute.xlu0 %1786
    %1788 = vrot.lane.b32.xlu0 %v1326, 104
    %v1789 = vpop.permute.xlu0 %1788
    %1790 = vrot.lane.b32.xlu0 %v1320, 72
    %v1791 = vpop.permute.xlu0 %1790
    %1792 = vrot.lane.b32.xlu0 %v1323, 72
    %v1793 = vpop.permute.xlu0 %1792
    %v1794 = vsel %vm466, %v1787, 0
    %v1796 = vsel %vm466, %v1789, 0
    %v1798 = vsel %vm466, %v1791, 0
    %v1800 = vsel %vm466, %v1793, 0
    %1802 = vmatpush.xpose.msra.mxu0 0.0
    %1803 = vmatpush.xpose.msra.mxu0 0.0
    %1804 = vmatpush.xpose.msra.mxu0 0.0
    %1805 = vmatpush.xpose.msra.mxu0 0.0
    %1806 = vmatpush.xpose.msra.mxu0 0.0
    %1807 = vmatpush.xpose.msra.mxu0 0.0
    %1808 = vmatpush.xpose.msra.mxu0 0.0
    %1809 = vmatpush.xpose.msra.mxu0 0.0
    %1810 = vmatpush.xpose.msra.mxu0 0.0
    %1811 = vmatpush.xpose.msra.mxu0 0.0
    %1812 = vmatpush.xpose.msra.mxu0 0.0
    %1813 = vmatpush.xpose.msra.mxu0 0.0
    %1814 = vmatpush.xpose.msra.mxu0 0.0
    %1815 = vmatpush.xpose.msra.mxu0 0.0
    %1816 = vmatpush.xpose.msra.mxu0 %v1800
    %1817 = vmatpush.xpose.msra.mxu0 %v1798
    %1818 = vmatmul.f32.gmra.mxu0 %v1794
    %v1819 = vpop.f32.mrf.mxu0
    %v1820 = vadd.f32 %v415, %v1819
    %1821 = vmatmul.f32.gmra.mxu0 %v1796
    %v1822 = vpop.f32.mrf.mxu0
    %v1823 = vadd.f32 %v416, %v1822
    %1824 = vdwg.mxu0
    %v1825 = vsel %vm500, %v1820, -inf
    %1826 = vmax.xlane.f32.xlu0 %v1825
    %v1827 = vpop.xlane.xlu0 %1826
    %v1828 = vsel %vm500, %v1823, -inf
    %1829 = vmax.xlane.f32.xlu0 %v1828
    %v1830 = vpop.xlane.xlu0 %1829
    %v1831 = vsub.f32 %v1820, %v1827
    %v1832 = vsub.f32 %v1823, %v1830
    %v1833 = vmul.f32 %v1831, 1.442695
    %v1834 = vpow.pop %v1833
    %v1835 = vmul.f32 %v1832, 1.442695
    %v1836 = vpow.pop %v1835
    %v1837 = vsel %vm500, %v1834, 0.0
    %1838 = vadd.xlane.f32.xlu0 %v1837
    %v1839 = vpop.xlane.xlu0 %1838
    %v1840 = vsel %vm500, %v1836, 0.0
    %1841 = vadd.xlane.f32.xlu0 %v1840
    %v1842 = vpop.xlane.xlu0 %1841
    %v1843 = vrcp.pop %v1839
    %v1844 = vmul.f32 %v1839, %v1843
    %v1845 = vsub.f32 1.0, %v1844
    %v1846 = vmul.f32 %v1843, %v1845
    %v1847 = vadd.f32 %v1843, %v1846
    %vm1848 = vweird.f32 %v1839
    %vm1849 = vweird.f32 %v1843
    %vm1850 = vmor %vm1848, %vm1849
    %v1851 = vsel %vm1850, %v1843, %v1847
    %v1852 = vand.u32 2147483647, %v1839
    %vm1853 = vcmp.eq.f32.partialorder %v1852, 8.507059e+37
    %v1854 = vand.u32 %v1839, 2147483648
    %v1855 = vor.u32 1.1754944e-38, %v1854
    %v1856 = vsel %vm1853, %v1855, %v1851
    %v1857 = vrcp.pop %v1842
    %v1858 = vmul.f32 %v1842, %v1857
    %v1859 = vsub.f32 1.0, %v1858
    %v1860 = vmul.f32 %v1857, %v1859
    %v1861 = vadd.f32 %v1857, %v1860
    %vm1862 = vweird.f32 %v1842
    %vm1863 = vweird.f32 %v1857
    %vm1864 = vmor %vm1862, %vm1863
    %v1865 = vsel %vm1864, %v1857, %v1861
    %v1866 = vand.u32 2147483647, %v1842
    %vm1867 = vcmp.eq.f32.partialorder %v1866, 8.507059e+37
    %v1868 = vand.u32 %v1842, 2147483648
    %v1869 = vor.u32 1.1754944e-38, %v1868
    %v1870 = vsel %vm1867, %v1869, %v1865
    %1871 = vrot.lane.b32.xlu0 %v1320, 40
    %v1872 = vpop.permute.xlu0 %1871
    %1873 = vrot.lane.b32.xlu0 %v1323, 40
    %v1874 = vpop.permute.xlu0 %1873
    %v1878 = vsel %vm500, %v1834, 0
    %v1881 = vsel %vm500, %v1836, 0
    %1883 = vmatpush.msra.mxu0 0.0
    %1884 = vmatpush.msra.mxu0 0.0
    %1885 = vmatpush.msra.mxu0 0.0
    %1886 = vmatpush.msra.mxu0 0.0
    %1887 = vmatpush.msra.mxu0 0.0
    %1888 = vmatpush.msra.mxu0 0.0
    %1889 = vmatpush.msra.mxu0 0.0
    %1890 = vmatpush.msra.mxu0 0.0
    %1891 = vmatpush.msra.mxu0 0.0
    %1892 = vmatpush.msra.mxu0 0.0
    %1893 = vmatpush.msra.mxu0 0.0
    %1894 = vmatpush.msra.mxu0 0.0
    %1895 = vmatpush.msra.mxu0 0.0
    %1896 = vmatpush.msra.mxu0 0.0
    %1897 = vmatpush.msra.mxu0 %v1874
    %1898 = vmatpush.msra.mxu0 %v1872
    %1899 = vmatmul.f32.gmra.mxu0 %v1878
    %v1900 = vpop.f32.mrf.mxu0
    %v1901 = vadd.f32 0.0, %v1900
    %1902 = vmatmul.f32.gmra.mxu0 %v1881
    %v1903 = vpop.f32.mrf.mxu0
    %v1904 = vadd.f32 0.0, %v1903
    %1905 = vdwg.mxu0
    %v1906 = vmul.f32 %v1901, %v1856
    %v1907 = vmul.f32 %v1904, %v1870
    %v1909 = vsel %vm466, %v1906, 0
    %v1912 = vsel %vm466, %v1907, 0
    %1914 = vmatpush.msra.mxu0 0.0
    %1915 = vmatpush.msra.mxu0 0.0
    %1916 = vmatpush.msra.mxu0 0.0
    %1917 = vmatpush.msra.mxu0 0.0
    %1918 = vmatpush.msra.mxu0 0.0
    %1919 = vmatpush.msra.mxu0 0.0
    %1920 = vmatpush.msra.mxu0 0.0
    %1921 = vmatpush.msra.mxu0 0.0
    %1922 = vmatpush.msra.mxu0 0.0
    %1923 = vmatpush.msra.mxu0 0.0
    %1924 = vmatpush.msra.mxu0 0.0
    %1925 = vmatpush.msra.mxu0 0.0
    %1926 = vmatpush.msra.mxu0 0.0
    %1927 = vmatpush.msra.mxu0 0.0
    %1928 = vmatpush.msra.mxu0 0.0
    %1929 = vmatpush.msra.mxu0 %v1330
    %1930 = vmatmul.f32.gmra.mxu0 %v1909
    %v1931 = vpop.f32.mrf.mxu0
    %v1932 = vadd.f32 0.0, %v1931
    %1933 = vmatmul.f32.gmra.mxu0 %v1912
    %v1934 = vpop.f32.mrf.mxu0
    %v1935 = vadd.f32 0.0, %v1934
    %1936 = vdwg.mxu0
    %v1937 = vadd.f32 %v1784, %v1932
    %v1938 = vadd.f32 %v1785, %v1935
    %v1939 = vld [vmem:[%s53] sm:$0x1]
    %v1941 = vperm.slane %v1939, 0
    %v1943 = vadd.f32 %v1937, %v1941
    %v1944 = vadd.f32 %v1938, %v1941
    %v1945 = vadd.f32 %v1286, %v1943
    %v1946 = vadd.f32 %v1287, %v1944
    %v1947 = vld [vmem:[%s55] sm:$0x1]
    %v1948 = vld [vmem:[%s57] sm:$0x1]
    %v1949 = vsel %vm194, %v1945, 0.0
    %1950 = vadd.xlane.f32.xlu0 %v1949
    %v1951 = vpop.xlane.xlu0 %1950
    %v1952 = vsel %vm194, %v1946, 0.0
    %1953 = vadd.xlane.f32.xlu0 %v1952
    %v1954 = vpop.xlane.xlu0 %1953
    %v1955 = vmul.f32 %v1951, %v366
    %v1956 = vmul.f32 %v1954, %v366
    %v1957 = vsub.f32 %v1945, %v1955
    %v1958 = vsub.f32 %v1946, %v1956
    %v1959 = vmul.f32 %v1957, %v1957
    %v1960 = vmul.f32 %v1958, %v1958
    %v1961 = vsel %vm194, %v1959, 0.0
    %1962 = vadd.xlane.f32.xlu0 %v1961
    %v1963 = vpop.xlane.xlu0 %1962
    %v1964 = vsel %vm194, %v1960, 0.0
    %1965 = vadd.xlane.f32.xlu0 %v1964
    %v1966 = vpop.xlane.xlu0 %1965
    %v1967 = vmul.f32 %v1963, %v366
    %v1968 = vmul.f32 %v1966, %v366
    %v1969 = vadd.f32 %v1967, 1e-05
    %v1970 = vadd.f32 %v1968, 1e-05
    %v1971 = vrsqrt.pop %v1969
    %v1972 = vmul.f32 %v1971, %v1969
    %v1973 = vmul.f32 %v1972, %v1971
    %v1974 = vmul.f32 0.5, %v1973
    %v1975 = vsub.f32 1.5, %v1974
    %v1976 = vmul.f32 %v1971, %v1975
    %vm1977 = vweird.f32 %v1969
    %vm1978 = vweird.f32 %v1971
    %vm1979 = vmor %vm1977, %vm1978
    %v1980 = vsel %vm1979, %v1971, %v1976
    %v1981 = vrsqrt.pop %v1970
    %v1982 = vmul.f32 %v1981, %v1970
    %v1983 = vmul.f32 %v1982, %v1981
    %v1984 = vmul.f32 0.5, %v1983
    %v1985 = vsub.f32 1.5, %v1984
    %v1986 = vmul.f32 %v1981, %v1985
    %vm1987 = vweird.f32 %v1970
    %vm1988 = vweird.f32 %v1981
    %vm1989 = vmor %vm1987, %vm1988
    %v1990 = vsel %vm1989, %v1981, %v1986
    %v1991 = vmul.f32 %v1957, %v1980
    %v1992 = vmul.f32 %v1958, %v1990
    %v1994 = vperm.slane %v1947, 0
    %v1996 = vmul.f32 %v1991, %v1994
    %v1997 = vmul.f32 %v1992, %v1994
    %v1999 = vperm.slane %v1948, 0
    %v2001 = vadd.f32 %v1996, %v1999
    %v2002 = vadd.f32 %v1997, %v1999
    %v2003 = vld [vmem:[%s59] sm:$0xff]
    %v2004 = vld [vmem:[%s59 + $0x8] sm:$0xff]
    %v2005 = vld [vmem:[%s59 + $0x10] sm:$0xff]
    %v2006 = vld [vmem:[%s59 + $0x18] sm:$0xff]
    %v2007 = vld [vmem:[%s61] sm:$0x1]
    %v2009 = vperm.slane %v2007, 0
    %v2012 = vsel %vm194, %v2001, 0
    %v2015 = vsel %vm194, %v2002, 0
    %2017 = vmatpush.msra.mxu0 0.0
    %2018 = vmatpush.msra.mxu0 0.0
    %2019 = vmatpush.msra.mxu0 0.0
    %2020 = vmatpush.msra.mxu0 0.0
    %2021 = vmatpush.msra.mxu0 0.0
    %2022 = vmatpush.msra.mxu0 0.0
    %2023 = vmatpush.msra.mxu0 0.0
    %2024 = vmatpush.msra.mxu0 0.0
    %2025 = vmatpush.msra.mxu0 0.0
    %2026 = vmatpush.msra.mxu0 0.0
    %2027 = vmatpush.msra.mxu0 0.0
    %2028 = vmatpush.msra.mxu0 0.0
    %2029 = vmatpush.msra.mxu0 %v2006
    %2030 = vmatpush.msra.mxu0 %v2005
    %2031 = vmatpush.msra.mxu0 %v2004
    %2032 = vmatpush.msra.mxu0 %v2003
    %2033 = vmatmul.f32.gmra.mxu0 %v2012
    %v2034 = vpop.f32.mrf.mxu0
    %v2035 = vadd.f32 %v2009, %v2034
    %2036 = vmatmul.f32.gmra.mxu0 %v2015
    %v2037 = vpop.f32.mrf.mxu0
    %v2038 = vadd.f32 %v2009, %v2037
    %2039 = vdwg.mxu0
    %v2040 = vmul.f32 %v2035, 0.5
    %v2041 = vmul.f32 %v2038, 0.5
    %v2042 = vmul.f32 %v2035, %v2035
    %v2043 = vmul.f32 %v2038, %v2038
    %v2044 = vmul.f32 %v2035, %v2042
    %v2045 = vmul.f32 %v2038, %v2043
    %v2046 = vmul.f32 %v2044, 0.044715
    %v2047 = vmul.f32 %v2045, 0.044715
    %v2048 = vadd.f32 %v2035, %v2046
    %v2049 = vadd.f32 %v2038, %v2047
    %v2050 = vmul.f32 %v2048, 0.7978846
    %v2051 = vmul.f32 %v2049, 0.7978846
    %v2052 = vtanh.pop %v2050
    %v2053 = vtanh.pop %v2051
    %v2054 = vadd.f32 %v2052, 1.0
    %v2055 = vadd.f32 %v2053, 1.0
    %v2056 = vmul.f32 %v2040, %v2054
    %v2057 = vmul.f32 %v2041, %v2055
    %v2058 = vld [vmem:[%s63] sm:$0xff]
    %v2059 = vld [vmem:[%s63 + $0x8] sm:$0xff]
    %v2060 = vld [vmem:[%s63 + $0x10] sm:$0xff]
    %v2061 = vld [vmem:[%s63 + $0x18] sm:$0xff]
    %v2062 = vld [vmem:[%s63 + $0x20] sm:$0xff]
    %v2063 = vld [vmem:[%s63 + $0x28] sm:$0xff]
    %v2064 = vld [vmem:[%s63 + $0x30] sm:$0xff]
    %v2065 = vld [vmem:[%s63 + $0x38] sm:$0xff]
    %v2066 = vld [vmem:[%s65] sm:$0x1]
    %v2068 = vperm.slane %v2066, 0
    %v2071 = vsel %vm167, %v2056, 0
    %v2074 = vsel %vm167, %v2057, 0
    %2076 = vmatpush.msra.mxu0 0.0
    %2077 = vmatpush.msra.mxu0 0.0
    %2078 = vmatpush.msra.mxu0 0.0
    %2079 = vmatpush.msra.mxu0 0.0
    %2080 = vmatpush.msra.mxu0 0.0
    %2081 = vmatpush.msra.mxu0 0.0
    %2082 = vmatpush.msra.mxu0 0.0
    %2083 = vmatpush.msra.mxu0 0.0
    %2084 = vmatpush.msra.mxu0 %v2065
    %2085 = vmatpush.msra.mxu0 %v2064
    %2086 = vmatpush.msra.mxu0 %v2063
    %2087 = vmatpush.msra.mxu0 %v2062
    %2088 = vmatpush.msra.mxu0 %v2061
    %2089 = vmatpush.msra.mxu0 %v2060
    %2090 = vmatpush.msra.mxu0 %v2059
    %2091 = vmatpush.msra.mxu0 %v2058
    %2092 = vmatmul.f32.gmra.mxu0 %v2071
    %v2093 = vpop.f32.mrf.mxu0
    %v2094 = vadd.f32 %v2068, %v2093
    %2095 = vmatmul.f32.gmra.mxu0 %v2074
    %v2096 = vpop.f32.mrf.mxu0
    %v2097 = vadd.f32 %v2068, %v2096
    %2098 = vdwg.mxu0
    %v2099 = vadd.f32 %v2001, %v2094
    %v2100 = vadd.f32 %v2002, %v2097
    %v2101 = vld [vmem:[%s67] sm:$0x1]
    %v2102 = vld [vmem:[%s69] sm:$0x1]
    %v2103 = vsel %vm194, %v2099, 0.0
    %2104 = vadd.xlane.f32.xlu0 %v2103
    %v2105 = vpop.xlane.xlu0 %2104
    %v2106 = vsel %vm194, %v2100, 0.0
    %2107 = vadd.xlane.f32.xlu0 %v2106
    %v2108 = vpop.xlane.xlu0 %2107
    %v2109 = vmul.f32 %v2105, %v366
    %v2110 = vmul.f32 %v2108, %v366
    %v2111 = vsub.f32 %v2099, %v2109
    %v2112 = vsub.f32 %v2100, %v2110
    %v2113 = vmul.f32 %v2111, %v2111
    %v2114 = vmul.f32 %v2112, %v2112
    %v2115 = vsel %vm194, %v2113, 0.0
    %2116 = vadd.xlane.f32.xlu0 %v2115
    %v2117 = vpop.xlane.xlu0 %2116
    %v2118 = vsel %vm194, %v2114, 0.0
    %2119 = vadd.xlane.f32.xlu0 %v2118
    %v2120 = vpop.xlane.xlu0 %2119
    %v2121 = vmul.f32 %v2117, %v366
    %v2122 = vmul.f32 %v2120, %v366
    %v2123 = vadd.f32 %v2121, 1e-05
    %v2124 = vadd.f32 %v2122, 1e-05
    %v2125 = vrsqrt.pop %v2123
    %v2126 = vmul.f32 %v2125, %v2123
    %v2127 = vmul.f32 %v2126, %v2125
    %v2128 = vmul.f32 0.5, %v2127
    %v2129 = vsub.f32 1.5, %v2128
    %v2130 = vmul.f32 %v2125, %v2129
    %vm2131 = vweird.f32 %v2123
    %vm2132 = vweird.f32 %v2125
    %vm2133 = vmor %vm2131, %vm2132
    %v2134 = vsel %vm2133, %v2125, %v2130
    %v2135 = vrsqrt.pop %v2124
    %v2136 = vmul.f32 %v2135, %v2124
    %v2137 = vmul.f32 %v2136, %v2135
    %v2138 = vmul.f32 0.5, %v2137
    %v2139 = vsub.f32 1.5, %v2138
    %v2140 = vmul.f32 %v2135, %v2139
    %vm2141 = vweird.f32 %v2124
    %vm2142 = vweird.f32 %v2135
    %vm2143 = vmor %vm2141, %vm2142
    %v2144 = vsel %vm2143, %v2135, %v2140
    %v2145 = vmul.f32 %v2111, %v2134
    %v2146 = vmul.f32 %v2112, %v2144
    %v2148 = vperm.slane %v2101, 0
    %v2150 = vmul.f32 %v2145, %v2148
    %v2151 = vmul.f32 %v2146, %v2148
    %v2153 = vperm.slane %v2102, 0
    %v2155 = vadd.f32 %v2150, %v2153
    %v2156 = vadd.f32 %v2151, %v2153
    %2157 = vst.msk [vmem:[#allocation2] sm:$0xff] %vm194, %v2155
    %2158 = vst.msk [vmem:[#allocation2 + $0x8] sm:$0xff] %vm194, %v2156
    // Predicated region
    $region142: #{forward_pallas.1} parent=1 // pred_check
      _
    $region143: #{forward_pallas.1} parent=1 // pred_check_branch
      %2160 = sbr.rel (0) target = $region145
    $region144: #{forward_pallas.1} parent=1 // pred_region
      %2162 = vsyncadd [#allocation3], 0
      %s2163 = sshll.u32 [#allocation2], 4
      %s2164 = int_to_ptr.vmem [resolvable:$true] %s2163
      %s2165 = sshll.u32 %s71, 4
      %s2166 = int_to_ptr.hbm [resolvable:$true] %s2165
      %2171 = dma.vmem_to_hbm [thread:$0]  %s2164, 256, %s2166, [#allocation3], 128, 128, 8
    $region145: #{forward_pallas.1} parent=1 // pred_fallthru
      _
    // Predicated region
    $region146: #{forward_pallas.1} parent=1 // pred_check
      _
    $region147: #{forward_pallas.1} parent=1 // pred_check_branch
      %2173 = sbr.rel (0) target = $region149
    $region148: #{forward_pallas.1} parent=1 // pred_region
      %2175 = dma.done [#allocation3], 256
    $region149: #{forward_pallas.1} parent=1 // pred_fallthru
      _
    %2176 = vsyncpa [#allocation3], 1

</llo_original>
